<compile_context>
chip_gen: v5e
topology: v5e:2x2
jax: 0.10.0
libtpu: 0.0.40
codegen_flags: <defaults>
</compile_context>

<pallas_src>
import functools

import jax
import jax.numpy as jnp
from jax.experimental import pallas as pl
from jax.experimental.pallas import tpu as pltpu


def _round_up(n, m):
    return (n + m - 1) // m * m


def _leaky(x, slope=0.1):
    return jnp.where(x > 0, x, slope * x)


def _discriminator_kernel(xx_ref, w1a_ref, w1b_ref, w2a_ref, w2b_ref,
                          w3_ref, b3_ref, w4_ref, b4_ref, w5_ref, b5_ref,
                          out_ref, *, L2):
    """One batch tile of the full forward pass, all operands resident in VMEM.

    xx_ref  : (TB, L2+2)      input, zero-padded by 2 on each side of time
    w1a/w1b : (L2, L2*32)     conv1 taps expanded to per-timestep row maps
    w2a/w2b : (L2*32, L2*64)  conv2 taps as block-diagonal matrices
    w3      : (L2*64, 64)     Linear-1 weight, pre-permuted to t-major order
    b3      : (1, 64)
    w4/b4   : (64, 32) / (1, 32)
    w5/b5   : (1, 32) / (1, 1)  final Linear as a lane-reduction row vector
    out_ref : (TB, 128)       lane-dense output slab; column 0 is the result
    """
    xx = xx_ref[...]
    xa0 = xx[:, 0:L2]        # x_pad shifted right by one time step
    xa1 = xx[:, 1:L2 + 1]    # x_pad itself
    xb1 = xx[:, 2:L2 + 2]    # x_pad shifted left by one time step

    # conv1 (1->32, k=2, p=1) + LeakyReLU, produced directly in flattened
    # (t-major, c-minor) layout for the two time-shifted views conv2 needs.
    # Padding rows come out as leaky(0) == 0 automatically.
    ya = _leaky(jnp.dot(xa0, w1a_ref[...], preferred_element_type=jnp.float32)
                + jnp.dot(xa1, w1b_ref[...], preferred_element_type=jnp.float32))
    yb = _leaky(jnp.dot(xa1, w1a_ref[...], preferred_element_type=jnp.float32)
                + jnp.dot(xb1, w1b_ref[...], preferred_element_type=jnp.float32))

    # conv2 (32->64, k=2, p=1) + LeakyReLU as two large block-diagonal matmuls;
    # result is already the flattened (t-major, c-minor) feature slab.
    h2 = _leaky(jnp.dot(ya, w2a_ref[...], preferred_element_type=jnp.float32)
                + jnp.dot(yb, w2b_ref[...], preferred_element_type=jnp.float32))

    # Flatten + Linear(L2*64 -> 64) + LeakyReLU (W3 pre-permuted on the host
    # to match the t-major/c-minor order above).
    h3 = _leaky(jnp.dot(h2, w3_ref[...], preferred_element_type=jnp.float32)
                + b3_ref[...])

    # Dropout(0.2): identity (eval-mode semantics).
    h4 = _leaky(jnp.dot(h3, w4_ref[...], preferred_element_type=jnp.float32)
                + b4_ref[...])

    # Dropout(0.2): identity.  Linear(32 -> 1) as a lane reduction (an N=1 MXU
    # matmul would waste 127/128 output columns); store lane-dense.
    out = jnp.sum(h4 * w5_ref[...], axis=-1, keepdims=True) + b5_ref[...]
    out_ref[...] = jnp.broadcast_to(out, out_ref.shape)


def prepare_discriminator_params(params, l_in):
    """One-time preprocessing of the PyTorch-layout parameters (hoisted out of
    the per-call path).  Returns the tuple consumed by `discriminator_forward`."""
    w1, w2, W3, b3, W4, b4, W5, b5 = params
    L2 = l_in + 2                                   # length after both convs
    assert W3.shape == (64, 64 * L2), "Linear-1 in_features must be 64*(L_in+2)"
    f32 = jnp.float32
    eye = jnp.eye(L2, dtype=f32)

    # conv1 taps expanded so that  x_shift @ W1?  yields the flattened
    # (t-major, c-minor) conv1 pre-activation:  W1A[t, t*32+c] = w1[c,0,0].
    w1a_tap = w1[:, 0, 0].astype(f32)               # (32,)
    w1b_tap = w1[:, 0, 1].astype(f32)
    W1A = (eye[:, :, None] * w1a_tap[None, None, :]).reshape(L2, L2 * 32)
    W1B = (eye[:, :, None] * w1b_tap[None, None, :]).reshape(L2, L2 * 32)

    # conv2 taps as block-diagonal matrices acting on the flattened slab:
    # W2A[t*32+c, t*64+o] = w2[o, c, 0]   (zero off the t-diagonal).
    w2a = jnp.transpose(w2[:, :, 0]).astype(f32)    # (32, 64) as [c, o]
    w2b = jnp.transpose(w2[:, :, 1]).astype(f32)
    W2A = (eye[:, None, :, None] * w2a[None, :, None, :]).reshape(L2 * 32, L2 * 64)
    W2B = (eye[:, None, :, None] * w2b[None, :, None, :]).reshape(L2 * 32, L2 * 64)

    # PyTorch flatten is channel-major (flat[c*L2 + t]); the kernel produces a
    # t-major/c-minor slab, so permute W3 once: W3p[t*64+c, j] = W3[j, c*L2+t].
    W3p = jnp.transpose(W3.reshape(64, 64, L2), (2, 1, 0)).reshape(L2 * 64, 64)
    W3p = W3p.astype(f32)

    return (W1A, W1B, W2A, W2B, W3p,
            b3.reshape(1, 64).astype(f32),
            jnp.transpose(W4).astype(f32), b4.reshape(1, 32).astype(f32),
            W5.reshape(1, 32).astype(f32), b5.reshape(1, 1).astype(f32))


def discriminator_forward(x_ncl, prepped):
    """x_ncl: (B, 1, L_in) PyTorch NCL layout.  Returns (B, 1).
    Dropout layers behave as identity (inference semantics)."""
    W1A, W1B, W2A, W2B, W3p, b3r, W4t, b4r, w5r, b5r = prepped
    B, cin, l_in = x_ncl.shape
    assert cin == 1
    L2 = l_in + 2

    # Batch tile: multiple of 8 sublanes; pad batch rows up to it (padded rows
    # compute garbage that is sliced off below).
    TB = min(_round_up(B, 8), 512)
    Bp = _round_up(B, TB)

    # Minimal per-call glue: squeeze the channel dim and do a single pad that
    # covers both the conv padding (+2 each side of time) and the batch tile.
    x2d = x_ncl[:, 0, :].astype(jnp.float32)                # (B, L_in)
    xx = jnp.pad(x2d, ((0, Bp - B), (2, 2)))                # (Bp, L2 + 2)

    def rep(a):   # replicated (untiled) weight: full-shape block, constant index
        return pl.BlockSpec(a.shape, lambda i: (0, 0))

    kernel = functools.partial(_discriminator_kernel, L2=L2)
    out = pl.pallas_call(
        kernel,
        out_shape=jax.ShapeDtypeStruct((Bp, 128), jnp.float32),
        grid=(Bp // TB,),
        in_specs=[pl.BlockSpec((TB, L2 + 2), lambda i: (i, 0)),
                  rep(W1A), rep(W1B), rep(W2A), rep(W2B), rep(W3p), rep(b3r),
                  rep(W4t), rep(b4r), rep(w5r), rep(b5r)],
        out_specs=pl.BlockSpec((TB, 128), lambda i: (i, 0)),
        compiler_params=pltpu.CompilerParams(
            dimension_semantics=("parallel",)),
    )(xx, W1A, W1B, W2A, W2B, W3p, b3r, W4t, b4r, w5r, b5r)
    return out[:B, :1]


def reference_forward(x_ncl, params):
    """Pure-JAX reference mirroring the PyTorch module exactly (NCL layout)."""
    w1, w2, W3, b3, W4, b4, W5, b5 = params
    lrelu = lambda v: jnp.where(v > 0, v, 0.1 * v)
    dn = ('NCH', 'OIH', 'NCH')
    h = lrelu(jax.lax.conv_general_dilated(
        x_ncl, w1, window_strides=(1,), padding=[(1, 1)], dimension_numbers=dn))
    h = lrelu(jax.lax.conv_general_dilated(
        h, w2, window_strides=(1,), padding=[(1, 1)], dimension_numbers=dn))
    flat = h.reshape(h.shape[0], -1)                        # channel-major flatten
    h3 = lrelu(flat @ W3.T + b3)
    h4 = lrelu(h3 @ W4.T + b4)
    return h4 @ W5.T + b5


if __name__ == "__main__":
    n_steps_in, n_steps_out = 6, 4
    B = 2
    L_total = n_steps_in + n_steps_out        # Linear-1 expects L_total*64 features
    L_in = L_total - 2                        # two k=2/p=1 convs grow L_in -> L_total

    key = jax.random.PRNGKey(0)
    ks = jax.random.split(key, 9)
    f32 = jnp.float32
    w1 = jax.random.normal(ks[0], (32, 1, 2), f32) * 0.1
    w2 = jax.random.normal(ks[1], (64, 32, 2), f32) * 0.1
    W3 = jax.random.normal(ks[2], (64, L_total * 64), f32) * 0.05
    b3 = jax.random.normal(ks[3], (64,), f32) * 0.05
    W4 = jax.random.normal(ks[4], (32, 64), f32) * 0.1
    b4 = jax.random.normal(ks[5], (32,), f32) * 0.1
    W5 = jax.random.normal(ks[6], (1, 32), f32) * 0.1
    b5 = jax.random.normal(ks[7], (1,), f32) * 0.1
    x = jax.random.normal(ks[8], (B, 1, L_in), f32)        # PyTorch NCL input

    params = (w1, w2, W3, b3, W4, b4, W5, b5)
    prepped = prepare_discriminator_params(params, L_in)   # one-time weight prep

    fwd = jax.jit(discriminator_forward)
    out = jax.block_until_ready(fwd(x, prepped))
    ref = jax.block_until_ready(reference_forward(x, params))
    assert out.shape == (B, 1), out.shape
    assert jnp.allclose(out, ref, atol=1e-4, rtol=1e-4), (out, ref)
    print("KERNEL_OK")
</pallas_src>

<mosaic_0001>
module attributes {stable_mosaic.version = 11 : i64} {
  func.func @_discriminator_kernel(%arg0: i32, %arg1: memref<8x12xf32, #tpu.memory_space<vmem>>, %arg2: memref<10x320xf32, #tpu.memory_space<vmem>>, %arg3: memref<10x320xf32, #tpu.memory_space<vmem>>, %arg4: memref<320x640xf32, #tpu.memory_space<vmem>>, %arg5: memref<320x640xf32, #tpu.memory_space<vmem>>, %arg6: memref<640x64xf32, #tpu.memory_space<vmem>>, %arg7: memref<1x64xf32, #tpu.memory_space<vmem>>, %arg8: memref<64x32xf32, #tpu.memory_space<vmem>>, %arg9: memref<1x32xf32, #tpu.memory_space<vmem>>, %arg10: memref<1x32xf32, #tpu.memory_space<vmem>>, %arg11: memref<1x1xf32, #tpu.memory_space<vmem>>, %arg12: memref<8x128xf32, #tpu.memory_space<vmem>>) attributes {dimension_semantics = [#tpu.dimension_semantics<parallel>], iteration_bounds = array<i64: 1>, scalar_prefetch = 0 : i64, scratch_operands = 0 : i64, tpu.core_type = #tpu.core_type<tc>, window_params = [{transform_indices = @transform_0, window_bounds = array<i64: 8, 12>}, {pipeline_mode = #tpu.pipeline_mode<synchronous>, transform_indices = @transform_1, window_bounds = array<i64: 10, 320>}, {pipeline_mode = #tpu.pipeline_mode<synchronous>, transform_indices = @transform_2, window_bounds = array<i64: 10, 320>}, {pipeline_mode = #tpu.pipeline_mode<synchronous>, transform_indices = @transform_3, window_bounds = array<i64: 320, 640>}, {pipeline_mode = #tpu.pipeline_mode<synchronous>, transform_indices = @transform_4, window_bounds = array<i64: 320, 640>}, {pipeline_mode = #tpu.pipeline_mode<synchronous>, transform_indices = @transform_5, window_bounds = array<i64: 640, 64>}, {pipeline_mode = #tpu.pipeline_mode<synchronous>, transform_indices = @transform_6, window_bounds = array<i64: 1, 64>}, {pipeline_mode = #tpu.pipeline_mode<synchronous>, transform_indices = @transform_7, window_bounds = array<i64: 64, 32>}, {pipeline_mode = #tpu.pipeline_mode<synchronous>, transform_indices = @transform_8, window_bounds = array<i64: 1, 32>}, {pipeline_mode = #tpu.pipeline_mode<synchronous>, transform_indices = @transform_9, window_bounds = array<i64: 1, 32>}, {pipeline_mode = #tpu.pipeline_mode<synchronous>, transform_indices = @transform_10, window_bounds = array<i64: 1, 1>}, {transform_indices = @transform_11, window_bounds = array<i64: 8, 128>}]} {
    %c0 = arith.constant 0 : index
    %c0_0 = arith.constant 0 : index
    %0 = vector.load %arg1[%c0, %c0_0] : memref<8x12xf32, #tpu.memory_space<vmem>>, vector<8x12xf32>
    %1 = vector.extract_strided_slice %0 {offsets = [0, 0], sizes = [8, 10], strides = [1, 1]} : vector<8x12xf32> to vector<8x10xf32>
    %2 = vector.extract_strided_slice %0 {offsets = [0, 1], sizes = [8, 10], strides = [1, 1]} : vector<8x12xf32> to vector<8x10xf32>
    %3 = vector.extract_strided_slice %0 {offsets = [0, 2], sizes = [8, 10], strides = [1, 1]} : vector<8x12xf32> to vector<8x10xf32>
    %c0_1 = arith.constant 0 : index
    %c0_2 = arith.constant 0 : index
    %4 = vector.load %arg2[%c0_1, %c0_2] : memref<10x320xf32, #tpu.memory_space<vmem>>, vector<10x320xf32>
    %cst = arith.constant dense<0.000000e+00> : vector<8x320xf32>
    %5 = tpu.matmul %1, %4, %cst {dimension_numbers = #tpu.dot_dimension_numbers<[1], [0], [0], [1], [0, 0, 1, 1], [], []>} : vector<8x10xf32>, vector<10x320xf32>, vector<8x320xf32> -> vector<8x320xf32>
    %c0_3 = arith.constant 0 : index
    %c0_4 = arith.constant 0 : index
    %6 = vector.load %arg3[%c0_3, %c0_4] : memref<10x320xf32, #tpu.memory_space<vmem>>, vector<10x320xf32>
    %cst_5 = arith.constant dense<0.000000e+00> : vector<8x320xf32>
    %7 = tpu.matmul %2, %6, %cst_5 {dimension_numbers = #tpu.dot_dimension_numbers<[1], [0], [0], [1], [0, 0, 1, 1], [], []>} : vector<8x10xf32>, vector<10x320xf32>, vector<8x320xf32> -> vector<8x320xf32>
    %8 = arith.addf %5, %7 : vector<8x320xf32>
    %cst_6 = arith.constant 0.000000e+00 : f32
    %9 = vector.broadcast %cst_6 : f32 to vector<8x320xf32>
    %10 = arith.cmpf ogt, %8, %9 : vector<8x320xf32>
    %cst_7 = arith.constant 1.000000e-01 : f32
    %11 = vector.broadcast %cst_7 : f32 to vector<8x320xf32>
    %12 = arith.mulf %11, %8 : vector<8x320xf32>
    %13 = arith.select %10, %8, %12 : vector<8x320xi1>, vector<8x320xf32>
    %c0_8 = arith.constant 0 : index
    %c0_9 = arith.constant 0 : index
    %14 = vector.load %arg2[%c0_8, %c0_9] : memref<10x320xf32, #tpu.memory_space<vmem>>, vector<10x320xf32>
    %cst_10 = arith.constant dense<0.000000e+00> : vector<8x320xf32>
    %15 = tpu.matmul %2, %14, %cst_10 {dimension_numbers = #tpu.dot_dimension_numbers<[1], [0], [0], [1], [0, 0, 1, 1], [], []>} : vector<8x10xf32>, vector<10x320xf32>, vector<8x320xf32> -> vector<8x320xf32>
    %c0_11 = arith.constant 0 : index
    %c0_12 = arith.constant 0 : index
    %16 = vector.load %arg3[%c0_11, %c0_12] : memref<10x320xf32, #tpu.memory_space<vmem>>, vector<10x320xf32>
    %cst_13 = arith.constant dense<0.000000e+00> : vector<8x320xf32>
    %17 = tpu.matmul %3, %16, %cst_13 {dimension_numbers = #tpu.dot_dimension_numbers<[1], [0], [0], [1], [0, 0, 1, 1], [], []>} : vector<8x10xf32>, vector<10x320xf32>, vector<8x320xf32> -> vector<8x320xf32>
    %18 = arith.addf %15, %17 : vector<8x320xf32>
    %cst_14 = arith.constant 0.000000e+00 : f32
    %19 = vector.broadcast %cst_14 : f32 to vector<8x320xf32>
    %20 = arith.cmpf ogt, %18, %19 : vector<8x320xf32>
    %cst_15 = arith.constant 1.000000e-01 : f32
    %21 = vector.broadcast %cst_15 : f32 to vector<8x320xf32>
    %22 = arith.mulf %21, %18 : vector<8x320xf32>
    %23 = arith.select %20, %18, %22 : vector<8x320xi1>, vector<8x320xf32>
    %c0_16 = arith.constant 0 : index
    %c0_17 = arith.constant 0 : index
    %24 = vector.load %arg4[%c0_16, %c0_17] : memref<320x640xf32, #tpu.memory_space<vmem>>, vector<320x640xf32>
    %cst_18 = arith.constant dense<0.000000e+00> : vector<8x640xf32>
    %25 = tpu.matmul %13, %24, %cst_18 {dimension_numbers = #tpu.dot_dimension_numbers<[1], [0], [0], [1], [0, 0, 1, 1], [], []>} : vector<8x320xf32>, vector<320x640xf32>, vector<8x640xf32> -> vector<8x640xf32>
    %c0_19 = arith.constant 0 : index
    %c0_20 = arith.constant 0 : index
    %26 = vector.load %arg5[%c0_19, %c0_20] : memref<320x640xf32, #tpu.memory_space<vmem>>, vector<320x640xf32>
    %cst_21 = arith.constant dense<0.000000e+00> : vector<8x640xf32>
    %27 = tpu.matmul %23, %26, %cst_21 {dimension_numbers = #tpu.dot_dimension_numbers<[1], [0], [0], [1], [0, 0, 1, 1], [], []>} : vector<8x320xf32>, vector<320x640xf32>, vector<8x640xf32> -> vector<8x640xf32>
    %28 = arith.addf %25, %27 : vector<8x640xf32>
    %cst_22 = arith.constant 0.000000e+00 : f32
    %29 = vector.broadcast %cst_22 : f32 to vector<8x640xf32>
    %30 = arith.cmpf ogt, %28, %29 : vector<8x640xf32>
    %cst_23 = arith.constant 1.000000e-01 : f32
    %31 = vector.broadcast %cst_23 : f32 to vector<8x640xf32>
    %32 = arith.mulf %31, %28 : vector<8x640xf32>
    %33 = arith.select %30, %28, %32 : vector<8x640xi1>, vector<8x640xf32>
    %c0_24 = arith.constant 0 : index
    %c0_25 = arith.constant 0 : index
    %34 = vector.load %arg6[%c0_24, %c0_25] : memref<640x64xf32, #tpu.memory_space<vmem>>, vector<640x64xf32>
    %cst_26 = arith.constant dense<0.000000e+00> : vector<8x64xf32>
    %35 = tpu.matmul %33, %34, %cst_26 {dimension_numbers = #tpu.dot_dimension_numbers<[1], [0], [0], [1], [0, 0, 1, 1], [], []>} : vector<8x640xf32>, vector<640x64xf32>, vector<8x64xf32> -> vector<8x64xf32>
    %c0_27 = arith.constant 0 : index
    %c0_28 = arith.constant 0 : index
    %36 = vector.load %arg7[%c0_27, %c0_28] : memref<1x64xf32, #tpu.memory_space<vmem>>, vector<1x64xf32>
    %37 = vector.broadcast %36 : vector<1x64xf32> to vector<8x64xf32>
    %38 = arith.addf %35, %37 : vector<8x64xf32>
    %cst_29 = arith.constant 0.000000e+00 : f32
    %39 = vector.broadcast %cst_29 : f32 to vector<8x64xf32>
    %40 = arith.cmpf ogt, %38, %39 : vector<8x64xf32>
    %cst_30 = arith.constant 1.000000e-01 : f32
    %41 = vector.broadcast %cst_30 : f32 to vector<8x64xf32>
    %42 = arith.mulf %41, %38 : vector<8x64xf32>
    %43 = arith.select %40, %38, %42 : vector<8x64xi1>, vector<8x64xf32>
    %c0_31 = arith.constant 0 : index
    %c0_32 = arith.constant 0 : index
    %44 = vector.load %arg8[%c0_31, %c0_32] : memref<64x32xf32, #tpu.memory_space<vmem>>, vector<64x32xf32>
    %cst_33 = arith.constant dense<0.000000e+00> : vector<8x32xf32>
    %45 = tpu.matmul %43, %44, %cst_33 {dimension_numbers = #tpu.dot_dimension_numbers<[1], [0], [0], [1], [0, 0, 1, 1], [], []>} : vector<8x64xf32>, vector<64x32xf32>, vector<8x32xf32> -> vector<8x32xf32>
    %c0_34 = arith.constant 0 : index
    %c0_35 = arith.constant 0 : index
    %46 = vector.load %arg9[%c0_34, %c0_35] : memref<1x32xf32, #tpu.memory_space<vmem>>, vector<1x32xf32>
    %47 = vector.broadcast %46 : vector<1x32xf32> to vector<8x32xf32>
    %48 = arith.addf %45, %47 : vector<8x32xf32>
    %cst_36 = arith.constant 0.000000e+00 : f32
    %49 = vector.broadcast %cst_36 : f32 to vector<8x32xf32>
    %50 = arith.cmpf ogt, %48, %49 : vector<8x32xf32>
    %cst_37 = arith.constant 1.000000e-01 : f32
    %51 = vector.broadcast %cst_37 : f32 to vector<8x32xf32>
    %52 = arith.mulf %51, %48 : vector<8x32xf32>
    %53 = arith.select %50, %48, %52 : vector<8x32xi1>, vector<8x32xf32>
    %c0_38 = arith.constant 0 : index
    %c0_39 = arith.constant 0 : index
    %54 = vector.load %arg10[%c0_38, %c0_39] : memref<1x32xf32, #tpu.memory_space<vmem>>, vector<1x32xf32>
    %55 = vector.broadcast %54 : vector<1x32xf32> to vector<8x32xf32>
    %56 = arith.mulf %53, %55 : vector<8x32xf32>
    %cst_40 = arith.constant dense<0.000000e+00> : vector<8xf32>
    %57 = vector.multi_reduction <add>, %56, %cst_40 [1] : vector<8x32xf32> to vector<8xf32>
    %58 = vector.shape_cast %57 : vector<8xf32> to vector<8x1xf32>
    %c0_41 = arith.constant 0 : index
    %c0_42 = arith.constant 0 : index
    %59 = vector.load %arg11[%c0_41, %c0_42] : memref<1x1xf32, #tpu.memory_space<vmem>>, vector<1x1xf32>
    %60 = vector.broadcast %59 : vector<1x1xf32> to vector<8x1xf32>
    %61 = arith.addf %58, %60 : vector<8x1xf32>
    %62 = vector.shape_cast %61 : vector<8x1xf32> to vector<8x1xf32>
    %63 = vector.broadcast %62 : vector<8x1xf32> to vector<8x128xf32>
    %c0_43 = arith.constant 0 : index
    %c0_44 = arith.constant 0 : index
    %64 = vector.load %arg12[%c0_43, %c0_44] : memref<8x128xf32, #tpu.memory_space<vmem>>, vector<8x128xf32>
    tpu.vector_store %arg12[%c0_43, %c0_44], %63 {strides = array<i32>} : memref<8x128xf32, #tpu.memory_space<vmem>>, vector<8x128xf32>,
    return
  }
  func.func @transform_0(%arg0: i32) -> (i32, i32) {
    %c0_i32 = arith.constant 0 : i32
    %c0_i32_0 = arith.constant 0 : i32
    return %arg0, %c0_i32 : i32, i32
  }
  func.func @transform_1(%arg0: i32) -> (i32, i32) {
    %c0_i32 = arith.constant 0 : i32
    %c0_i32_0 = arith.constant 0 : i32
    %c0_i32_1 = arith.constant 0 : i32
    return %c0_i32, %c0_i32_0 : i32, i32
  }
  func.func @transform_2(%arg0: i32) -> (i32, i32) {
    %c0_i32 = arith.constant 0 : i32
    %c0_i32_0 = arith.constant 0 : i32
    %c0_i32_1 = arith.constant 0 : i32
    return %c0_i32, %c0_i32_0 : i32, i32
  }
  func.func @transform_3(%arg0: i32) -> (i32, i32) {
    %c0_i32 = arith.constant 0 : i32
    %c0_i32_0 = arith.constant 0 : i32
    %c0_i32_1 = arith.constant 0 : i32
    return %c0_i32, %c0_i32_0 : i32, i32
  }
  func.func @transform_4(%arg0: i32) -> (i32, i32) {
    %c0_i32 = arith.constant 0 : i32
    %c0_i32_0 = arith.constant 0 : i32
    %c0_i32_1 = arith.constant 0 : i32
    return %c0_i32, %c0_i32_0 : i32, i32
  }
  func.func @transform_5(%arg0: i32) -> (i32, i32) {
    %c0_i32 = arith.constant 0 : i32
    %c0_i32_0 = arith.constant 0 : i32
    %c0_i32_1 = arith.constant 0 : i32
    return %c0_i32, %c0_i32_0 : i32, i32
  }
  func.func @transform_6(%arg0: i32) -> (i32, i32) {
    %c0_i32 = arith.constant 0 : i32
    %c0_i32_0 = arith.constant 0 : i32
    %c0_i32_1 = arith.constant 0 : i32
    return %c0_i32, %c0_i32_0 : i32, i32
  }
  func.func @transform_7(%arg0: i32) -> (i32, i32) {
    %c0_i32 = arith.constant 0 : i32
    %c0_i32_0 = arith.constant 0 : i32
    %c0_i32_1 = arith.constant 0 : i32
    return %c0_i32, %c0_i32_0 : i32, i32
  }
  func.func @transform_8(%arg0: i32) -> (i32, i32) {
    %c0_i32 = arith.constant 0 : i32
    %c0_i32_0 = arith.constant 0 : i32
    %c0_i32_1 = arith.constant 0 : i32
    return %c0_i32, %c0_i32_0 : i32, i32
  }
  func.func @transform_9(%arg0: i32) -> (i32, i32) {
    %c0_i32 = arith.constant 0 : i32
    %c0_i32_0 = arith.constant 0 : i32
    %c0_i32_1 = arith.constant 0 : i32
    return %c0_i32, %c0_i32_0 : i32, i32
  }
  func.func @transform_10(%arg0: i32) -> (i32, i32) {
    %c0_i32 = arith.constant 0 : i32
    %c0_i32_0 = arith.constant 0 : i32
    %c0_i32_1 = arith.constant 0 : i32
    return %c0_i32, %c0_i32_0 : i32, i32
  }
  func.func @transform_11(%arg0: i32) -> (i32, i32) {
    %c0_i32 = arith.constant 0 : i32
    %c0_i32_0 = arith.constant 0 : i32
    return %arg0, %c0_i32 : i32, i32
  }
}

</mosaic_0001>

<llo_original>
// kernel: discriminator_forward.1
$region0: #{discriminator_forward.1}
  #allocation0 [shape = 'u32[]', space=smem, size = 0x4, offset = 0x4, fixed_abs, tag = 'smem constant byte address 0x4 - core index']
  #allocation1 [shape = 'u32[72,128]{1,0:T(1,128)}', space=vmem, size = 0x9000, scoped, tag = 'internal scratch']
  #allocation2 [shape = 'f32[1,1]{1,0:T(1,128)S(1)}', space=vmem, size = 0x200, scoped, tag = 'scoped memory for discriminator_forward.1']
  %s0 = inlined_call_operand.vmem [shape: f32[8,12], index: 0, kind: input, shape index: {}]
  %s1 = inlined_call_operand.vmem [shape: f32[10,320], index: 1, kind: input, shape index: {}]
  %s2 = inlined_call_operand.vmem [shape: f32[10,320], index: 2, kind: input, shape index: {}]
  %s3 = inlined_call_operand.hbm [shape: f32[320,640], index: 3, kind: input, shape index: {}]
  %s4 = inlined_call_operand.hbm [shape: f32[320,640], index: 4, kind: input, shape index: {}]
  %s5 = inlined_call_operand.vmem [shape: f32[640,64], index: 5, kind: input, shape index: {}]
  %s6 = inlined_call_operand.vmem [shape: f32[1,64], index: 6, kind: input, shape index: {}]
  %s7 = inlined_call_operand.vmem [shape: f32[64,32], index: 7, kind: input, shape index: {}]
  %s8 = inlined_call_operand.vmem [shape: f32[1,32], index: 8, kind: input, shape index: {}]
  %s9 = inlined_call_operand.vmem [shape: f32[1,32], index: 9, kind: input, shape index: {}]
  %s10 = inlined_call_operand.<no memory space> [shape: f32[1,1], index: 10, kind: input, shape index: {}]
  %s11 = inlined_call_operand.vmem [shape: f32[8,128], index: 11, kind: output, shape index: {}]
  %s12 = sld [smem:[#allocation0]]
  $region62: #{discriminator_forward.1} parent=0
    _
  %s14 = ssub.s32 1, %s12
  %s15 = scalar_select 0, %s14, %s12
  %v16 = vstv %s10
  %17 = vst [vmem:[#allocation2] sm:$0x1] %v16
  $region1: #{discriminator_forward.1} parent=0
    #allocation3 [shape = 'u8[819200]{0}', space=vmem, size = 0xc8000, scoped, tag = 'input window, operand 3, single buffered']
    #allocation4 [shape = 's32[1]{0}', space=sflag, size = 0x4, scoped, tag = 'scoped memory for discriminator_forward.1']
    #allocation5 [shape = 'u8[819200]{0}', space=vmem, size = 0xc8000, scoped, tag = 'input window, operand 4, single buffered']
    #allocation6 [shape = 's32[1]{0}', space=sflag, size = 0x4, scoped, tag = 'scoped memory for discriminator_forward.1']
    %18 = vsyncpa [#allocation4], 0
    %19 = vsyncpa [#allocation6], 0
    // Predicated region
    $region2: #{discriminator_forward.1} parent=1 // pred_check
      _
    $region3: #{discriminator_forward.1} parent=1 // pred_check_branch
      %21 = sbr.rel (0) target = $region5
    $region4: #{discriminator_forward.1} parent=1 // pred_region
      _
    $region5: #{discriminator_forward.1} parent=1 // pred_fallthru
      _
    // Predicated region
    $region6: #{discriminator_forward.1} parent=1 // pred_check
      _
    $region7: #{discriminator_forward.1} parent=1 // pred_check_branch
      %23 = sbr.rel (0) target = $region9
    $region8: #{discriminator_forward.1} parent=1 // pred_region
      _
    $region9: #{discriminator_forward.1} parent=1 // pred_fallthru
      _
    // Predicated region
    $region10: #{discriminator_forward.1} parent=1 // pred_check
      _
    $region11: #{discriminator_forward.1} parent=1 // pred_check_branch
      %25 = sbr.rel (0) target = $region13
    $region12: #{discriminator_forward.1} parent=1 // pred_region
      _
    $region13: #{discriminator_forward.1} parent=1 // pred_fallthru
      _
    // Predicated region
    $region14: #{discriminator_forward.1} parent=1 // pred_check
      _
    $region15: #{discriminator_forward.1} parent=1 // pred_check_branch
      %27 = sbr.rel (0) target = $region17
    $region16: #{discriminator_forward.1} parent=1 // pred_region
      %29 = vsyncadd [#allocation4], 0
      %s30 = sshll.u32 %s3, 4
      %s31 = int_to_ptr.hbm [resolvable:$true] %s30
      %s32 = sshll.u32 [#allocation3], 4
      %s33 = int_to_ptr.vmem [resolvable:$true] %s32
      %38 = dma.hbm_to_vmem [thread:$0]  %s31, 25600, %s33, [#allocation4], 640, 640, 40
    $region17: #{discriminator_forward.1} parent=1 // pred_fallthru
      _
    // Predicated region
    $region18: #{discriminator_forward.1} parent=1 // pred_check
      _
    $region19: #{discriminator_forward.1} parent=1 // pred_check_branch
      %40 = sbr.rel (0) target = $region21
    $region20: #{discriminator_forward.1} parent=1 // pred_region
      %42 = vsyncadd [#allocation6], 0
      %s43 = sshll.u32 %s4, 4
      %s44 = int_to_ptr.hbm [resolvable:$true] %s43
      %s45 = sshll.u32 [#allocation5], 4
      %s46 = int_to_ptr.vmem [resolvable:$true] %s45
      %51 = dma.hbm_to_vmem [thread:$0]  %s44, 25600, %s46, [#allocation6], 640, 640, 40
    $region21: #{discriminator_forward.1} parent=1 // pred_fallthru
      _
    // Predicated region
    $region22: #{discriminator_forward.1} parent=1 // pred_check
      _
    $region23: #{discriminator_forward.1} parent=1 // pred_check_branch
      %53 = sbr.rel (0) target = $region25
    $region24: #{discriminator_forward.1} parent=1 // pred_region
      _
    $region25: #{discriminator_forward.1} parent=1 // pred_fallthru
      _
    // Predicated region
    $region26: #{discriminator_forward.1} parent=1 // pred_check
      _
    $region27: #{discriminator_forward.1} parent=1 // pred_check_branch
      %55 = sbr.rel (0) target = $region29
    $region28: #{discriminator_forward.1} parent=1 // pred_region
      _
    $region29: #{discriminator_forward.1} parent=1 // pred_fallthru
      _
    // Predicated region
    $region30: #{discriminator_forward.1} parent=1 // pred_check
      _
    $region31: #{discriminator_forward.1} parent=1 // pred_check_branch
      %57 = sbr.rel (0) target = $region33
    $region32: #{discriminator_forward.1} parent=1 // pred_region
      _
    $region33: #{discriminator_forward.1} parent=1 // pred_fallthru
      _
    // Predicated region
    $region34: #{discriminator_forward.1} parent=1 // pred_check
      _
    $region35: #{discriminator_forward.1} parent=1 // pred_check_branch
      %59 = sbr.rel (0) target = $region37
    $region36: #{discriminator_forward.1} parent=1 // pred_region
      _
    $region37: #{discriminator_forward.1} parent=1 // pred_fallthru
      _
    // Predicated region
    $region38: #{discriminator_forward.1} parent=1 // pred_check
      _
    $region39: #{discriminator_forward.1} parent=1 // pred_check_branch
      %61 = sbr.rel (0) target = $region41
    $region40: #{discriminator_forward.1} parent=1 // pred_region
      _
    $region41: #{discriminator_forward.1} parent=1 // pred_fallthru
      _
    // Predicated region
    $region42: #{discriminator_forward.1} parent=1 // pred_check
      _
    $region43: #{discriminator_forward.1} parent=1 // pred_check_branch
      %63 = sbr.rel (0) target = $region45
    $region44: #{discriminator_forward.1} parent=1 // pred_region
      _
    $region45: #{discriminator_forward.1} parent=1 // pred_fallthru
      _
    // Predicated region
    $region46: #{discriminator_forward.1} parent=1 // pred_check
      _
    $region47: #{discriminator_forward.1} parent=1 // pred_check_branch
      %65 = sbr.rel (0) target = $region49
    $region48: #{discriminator_forward.1} parent=1 // pred_region
      %67 = dma.done [#allocation4], 25600
    $region49: #{discriminator_forward.1} parent=1 // pred_fallthru
      _
    // Predicated region
    $region50: #{discriminator_forward.1} parent=1 // pred_check
      _
    $region51: #{discriminator_forward.1} parent=1 // pred_check_branch
      %69 = sbr.rel (0) target = $region53
    $region52: #{discriminator_forward.1} parent=1 // pred_region
      %71 = dma.done [#allocation6], 25600
    $region53: #{discriminator_forward.1} parent=1 // pred_fallthru
      _
    %v72 = vld [vmem:[%s0] sm:$0xff]
    %v73 = vld [vmem:[%s1] sm:$0xff]
    %v74 = vld [vmem:[%s1 + $0x8] sm:$0xff]
    %v75 = vld [vmem:[%s1 + $0x10] sm:$0xff]
    %v76 = vld [vmem:[%s1 + $0x18] sm:$0x3]
    %v77 = vld [vmem:[%s1 + $0x20] sm:$0x3]
    %v78 = vld [vmem:[%s1 + $0x28] sm:$0x3]
    %v79 = vld [vmem:[%s2] sm:$0xff]
    %v80 = vld [vmem:[%s2 + $0x8] sm:$0xff]
    %v81 = vld [vmem:[%s2 + $0x10] sm:$0xff]
    %v82 = vld [vmem:[%s2 + $0x18] sm:$0x3]
    %v83 = vld [vmem:[%s2 + $0x20] sm:$0x3]
    %v84 = vld [vmem:[%s2 + $0x28] sm:$0x3]
    %86 = vrot.lane.b32.xlu0 %v72, 127
    %v87 = vpop.permute.xlu0 %86
    %vm88 = vcmask 80896
    %v89 = vsel %vm88, %v87, 0
    %vm91 = vcmask 1041408
    %v93 = vsel %vm91, %v82, 0
    %v96 = vsel %vm91, %v83, 0
    %v99 = vsel %vm91, %v84, 0
    %101 = vmatpush.msra.mxu0 0.0
    %102 = vmatpush.msra.mxu0 0.0
    %103 = vmatpush.msra.mxu0 0.0
    %104 = vmatpush.msra.mxu0 0.0
    %105 = vmatpush.msra.mxu0 0.0
    %106 = vmatpush.msra.mxu0 0.0
    %107 = vmatpush.msra.mxu0 0.0
    %108 = vmatpush.msra.mxu0 0.0
    %109 = vmatpush.msra.mxu0 0.0
    %110 = vmatpush.msra.mxu0 0.0
    %111 = vmatpush.msra.mxu0 0.0
    %112 = vmatpush.msra.mxu0 0.0
    %113 = vmatpush.msra.mxu0 0.0
    %114 = vmatpush.msra.mxu0 0.0
    %115 = vmatpush.msra.mxu0 %v93
    %116 = vmatpush.msra.mxu0 %v79
    %117 = vmatmul.f32.gmra.mxu0 %v89
    %v118 = vpop.f32.mrf.mxu0
    %v119 = vadd.f32 0.0, %v118
    %120 = vdwg.mxu0
    %121 = vmatpush.msra.mxu0 0.0
    %122 = vmatpush.msra.mxu0 0.0
    %123 = vmatpush.msra.mxu0 0.0
    %124 = vmatpush.msra.mxu0 0.0
    %125 = vmatpush.msra.mxu0 0.0
    %126 = vmatpush.msra.mxu0 0.0
    %127 = vmatpush.msra.mxu0 0.0
    %128 = vmatpush.msra.mxu0 0.0
    %129 = vmatpush.msra.mxu0 0.0
    %130 = vmatpush.msra.mxu0 0.0
    %131 = vmatpush.msra.mxu0 0.0
    %132 = vmatpush.msra.mxu0 0.0
    %133 = vmatpush.msra.mxu0 0.0
    %134 = vmatpush.msra.mxu0 0.0
    %135 = vmatpush.msra.mxu0 %v96
    %136 = vmatpush.msra.mxu0 %v80
    %137 = vmatmul.f32.gmra.mxu0 %v89
    %v138 = vpop.f32.mrf.mxu0
    %v139 = vadd.f32 0.0, %v138
    %140 = vdwg.mxu0
    %141 = vmatpush.msra.mxu0 0.0
    %142 = vmatpush.msra.mxu0 0.0
    %143 = vmatpush.msra.mxu0 0.0
    %144 = vmatpush.msra.mxu0 0.0
    %145 = vmatpush.msra.mxu0 0.0
    %146 = vmatpush.msra.mxu0 0.0
    %147 = vmatpush.msra.mxu0 0.0
    %148 = vmatpush.msra.mxu0 0.0
    %149 = vmatpush.msra.mxu0 0.0
    %150 = vmatpush.msra.mxu0 0.0
    %151 = vmatpush.msra.mxu0 0.0
    %152 = vmatpush.msra.mxu0 0.0
    %153 = vmatpush.msra.mxu0 0.0
    %154 = vmatpush.msra.mxu0 0.0
    %155 = vmatpush.msra.mxu0 %v99
    %156 = vmatpush.msra.mxu0 %v81
    %157 = vmatmul.f32.gmra.mxu0 %v89
    %v158 = vpop.f32.mrf.mxu0
    %v159 = vadd.f32 0.0, %v158
    %160 = vdwg.mxu0
    %v161 = vsel %vm88, %v72, 0
    %v164 = vsel %vm91, %v76, 0
    %v167 = vsel %vm91, %v77, 0
    %v170 = vsel %vm91, %v78, 0
    %172 = vmatpush.msra.mxu0 0.0
    %173 = vmatpush.msra.mxu0 0.0
    %174 = vmatpush.msra.mxu0 0.0
    %175 = vmatpush.msra.mxu0 0.0
    %176 = vmatpush.msra.mxu0 0.0
    %177 = vmatpush.msra.mxu0 0.0
    %178 = vmatpush.msra.mxu0 0.0
    %179 = vmatpush.msra.mxu0 0.0
    %180 = vmatpush.msra.mxu0 0.0
    %181 = vmatpush.msra.mxu0 0.0
    %182 = vmatpush.msra.mxu0 0.0
    %183 = vmatpush.msra.mxu0 0.0
    %184 = vmatpush.msra.mxu0 0.0
    %185 = vmatpush.msra.mxu0 0.0
    %186 = vmatpush.msra.mxu0 %v164
    %187 = vmatpush.msra.mxu0 %v73
    %188 = vmatmul.f32.gmra.mxu0 %v161
    %v189 = vpop.f32.mrf.mxu0
    %v190 = vadd.f32 %v119, %v189
    %191 = vdwg.mxu0
    %192 = vmatpush.msra.mxu0 0.0
    %193 = vmatpush.msra.mxu0 0.0
    %194 = vmatpush.msra.mxu0 0.0
    %195 = vmatpush.msra.mxu0 0.0
    %196 = vmatpush.msra.mxu0 0.0
    %197 = vmatpush.msra.mxu0 0.0
    %198 = vmatpush.msra.mxu0 0.0
    %199 = vmatpush.msra.mxu0 0.0
    %200 = vmatpush.msra.mxu0 0.0
    %201 = vmatpush.msra.mxu0 0.0
    %202 = vmatpush.msra.mxu0 0.0
    %203 = vmatpush.msra.mxu0 0.0
    %204 = vmatpush.msra.mxu0 0.0
    %205 = vmatpush.msra.mxu0 0.0
    %206 = vmatpush.msra.mxu0 %v167
    %207 = vmatpush.msra.mxu0 %v74
    %208 = vmatmul.f32.gmra.mxu0 %v161
    %v209 = vpop.f32.mrf.mxu0
    %v210 = vadd.f32 %v139, %v209
    %211 = vdwg.mxu0
    %212 = vmatpush.msra.mxu0 0.0
    %213 = vmatpush.msra.mxu0 0.0
    %214 = vmatpush.msra.mxu0 0.0
    %215 = vmatpush.msra.mxu0 0.0
    %216 = vmatpush.msra.mxu0 0.0
    %217 = vmatpush.msra.mxu0 0.0
    %218 = vmatpush.msra.mxu0 0.0
    %219 = vmatpush.msra.mxu0 0.0
    %220 = vmatpush.msra.mxu0 0.0
    %221 = vmatpush.msra.mxu0 0.0
    %222 = vmatpush.msra.mxu0 0.0
    %223 = vmatpush.msra.mxu0 0.0
    %224 = vmatpush.msra.mxu0 0.0
    %225 = vmatpush.msra.mxu0 0.0
    %226 = vmatpush.msra.mxu0 %v170
    %227 = vmatpush.msra.mxu0 %v75
    %228 = vmatmul.f32.gmra.mxu0 %v161
    %v229 = vpop.f32.mrf.mxu0
    %v230 = vadd.f32 %v159, %v229
    %231 = vdwg.mxu0
    %vm232 = vcmp.gt.f32.partialorder %v190, 0.0
    %vm233 = vcmp.gt.f32.partialorder %v210, 0.0
    %vm234 = vcmp.gt.f32.partialorder %v230, 0.0
    %v235 = vmul.f32 %v190, 0.1
    %v236 = vmul.f32 %v210, 0.1
    %v237 = vmul.f32 %v230, 0.1
    %v238 = vsel %vm232, %v190, %v235
    %v239 = vsel %vm233, %v210, %v236
    %v240 = vsel %vm234, %v230, %v237
    %241 = vrot.lane.b32.xlu0 %v72, 126
    %v242 = vpop.permute.xlu0 %241
    %v243 = vsel %vm88, %v242, 0
    %245 = vmatpush.msra.mxu0 0.0
    %246 = vmatpush.msra.mxu0 0.0
    %247 = vmatpush.msra.mxu0 0.0
    %248 = vmatpush.msra.mxu0 0.0
    %249 = vmatpush.msra.mxu0 0.0
    %250 = vmatpush.msra.mxu0 0.0
    %251 = vmatpush.msra.mxu0 0.0
    %252 = vmatpush.msra.mxu0 0.0
    %253 = vmatpush.msra.mxu0 0.0
    %254 = vmatpush.msra.mxu0 0.0
    %255 = vmatpush.msra.mxu0 0.0
    %256 = vmatpush.msra.mxu0 0.0
    %257 = vmatpush.msra.mxu0 0.0
    %258 = vmatpush.msra.mxu0 0.0
    %259 = vmatpush.msra.mxu0 %v93
    %260 = vmatpush.msra.mxu0 %v79
    %261 = vmatmul.f32.gmra.mxu0 %v243
    %v262 = vpop.f32.mrf.mxu0
    %v263 = vadd.f32 0.0, %v262
    %264 = vdwg.mxu0
    %265 = vmatpush.msra.mxu0 0.0
    %266 = vmatpush.msra.mxu0 0.0
    %267 = vmatpush.msra.mxu0 0.0
    %268 = vmatpush.msra.mxu0 0.0
    %269 = vmatpush.msra.mxu0 0.0
    %270 = vmatpush.msra.mxu0 0.0
    %271 = vmatpush.msra.mxu0 0.0
    %272 = vmatpush.msra.mxu0 0.0
    %273 = vmatpush.msra.mxu0 0.0
    %274 = vmatpush.msra.mxu0 0.0
    %275 = vmatpush.msra.mxu0 0.0
    %276 = vmatpush.msra.mxu0 0.0
    %277 = vmatpush.msra.mxu0 0.0
    %278 = vmatpush.msra.mxu0 0.0
    %279 = vmatpush.msra.mxu0 %v96
    %280 = vmatpush.msra.mxu0 %v80
    %281 = vmatmul.f32.gmra.mxu0 %v243
    %v282 = vpop.f32.mrf.mxu0
    %v283 = vadd.f32 0.0, %v282
    %284 = vdwg.mxu0
    %285 = vmatpush.msra.mxu0 0.0
    %286 = vmatpush.msra.mxu0 0.0
    %287 = vmatpush.msra.mxu0 0.0
    %288 = vmatpush.msra.mxu0 0.0
    %289 = vmatpush.msra.mxu0 0.0
    %290 = vmatpush.msra.mxu0 0.0
    %291 = vmatpush.msra.mxu0 0.0
    %292 = vmatpush.msra.mxu0 0.0
    %293 = vmatpush.msra.mxu0 0.0
    %294 = vmatpush.msra.mxu0 0.0
    %295 = vmatpush.msra.mxu0 0.0
    %296 = vmatpush.msra.mxu0 0.0
    %297 = vmatpush.msra.mxu0 0.0
    %298 = vmatpush.msra.mxu0 0.0
    %299 = vmatpush.msra.mxu0 %v99
    %300 = vmatpush.msra.mxu0 %v81
    %301 = vmatmul.f32.gmra.mxu0 %v243
    %v302 = vpop.f32.mrf.mxu0
    %v303 = vadd.f32 0.0, %v302
    %304 = vdwg.mxu0
    %305 = vmatpush.msra.mxu0 0.0
    %306 = vmatpush.msra.mxu0 0.0
    %307 = vmatpush.msra.mxu0 0.0
    %308 = vmatpush.msra.mxu0 0.0
    %309 = vmatpush.msra.mxu0 0.0
    %310 = vmatpush.msra.mxu0 0.0
    %311 = vmatpush.msra.mxu0 0.0
    %312 = vmatpush.msra.mxu0 0.0
    %313 = vmatpush.msra.mxu0 0.0
    %314 = vmatpush.msra.mxu0 0.0
    %315 = vmatpush.msra.mxu0 0.0
    %316 = vmatpush.msra.mxu0 0.0
    %317 = vmatpush.msra.mxu0 0.0
    %318 = vmatpush.msra.mxu0 0.0
    %319 = vmatpush.msra.mxu0 %v164
    %320 = vmatpush.msra.mxu0 %v73
    %321 = vmatmul.f32.gmra.mxu0 %v89
    %v322 = vpop.f32.mrf.mxu0
    %v323 = vadd.f32 %v263, %v322
    %324 = vdwg.mxu0
    %325 = vmatpush.msra.mxu0 0.0
    %326 = vmatpush.msra.mxu0 0.0
    %327 = vmatpush.msra.mxu0 0.0
    %328 = vmatpush.msra.mxu0 0.0
    %329 = vmatpush.msra.mxu0 0.0
    %330 = vmatpush.msra.mxu0 0.0
    %331 = vmatpush.msra.mxu0 0.0
    %332 = vmatpush.msra.mxu0 0.0
    %333 = vmatpush.msra.mxu0 0.0
    %334 = vmatpush.msra.mxu0 0.0
    %335 = vmatpush.msra.mxu0 0.0
    %336 = vmatpush.msra.mxu0 0.0
    %337 = vmatpush.msra.mxu0 0.0
    %338 = vmatpush.msra.mxu0 0.0
    %339 = vmatpush.msra.mxu0 %v167
    %340 = vmatpush.msra.mxu0 %v74
    %341 = vmatmul.f32.gmra.mxu0 %v89
    %v342 = vpop.f32.mrf.mxu0
    %v343 = vadd.f32 %v283, %v342
    %344 = vdwg.mxu0
    %345 = vmatpush.msra.mxu0 0.0
    %346 = vmatpush.msra.mxu0 0.0
    %347 = vmatpush.msra.mxu0 0.0
    %348 = vmatpush.msra.mxu0 0.0
    %349 = vmatpush.msra.mxu0 0.0
    %350 = vmatpush.msra.mxu0 0.0
    %351 = vmatpush.msra.mxu0 0.0
    %352 = vmatpush.msra.mxu0 0.0
    %353 = vmatpush.msra.mxu0 0.0
    %354 = vmatpush.msra.mxu0 0.0
    %355 = vmatpush.msra.mxu0 0.0
    %356 = vmatpush.msra.mxu0 0.0
    %357 = vmatpush.msra.mxu0 0.0
    %358 = vmatpush.msra.mxu0 0.0
    %359 = vmatpush.msra.mxu0 %v170
    %360 = vmatpush.msra.mxu0 %v75
    %361 = vmatmul.f32.gmra.mxu0 %v89
    %v362 = vpop.f32.mrf.mxu0
    %v363 = vadd.f32 %v303, %v362
    %364 = vdwg.mxu0
    %vm365 = vcmp.gt.f32.partialorder %v323, 0.0
    %vm366 = vcmp.gt.f32.partialorder %v343, 0.0
    %vm367 = vcmp.gt.f32.partialorder %v363, 0.0
    %v368 = vmul.f32 %v323, 0.1
    %v369 = vmul.f32 %v343, 0.1
    %v370 = vmul.f32 %v363, 0.1
    %v371 = vsel %vm365, %v323, %v368
    %v372 = vsel %vm366, %v343, %v369
    %v373 = vsel %vm367, %v363, %v370
    %v374 = vld [vmem:[#allocation3] sm:$0xff]
    %v375 = vld [vmem:[#allocation3 + $0x8] sm:$0xff]
    %v376 = vld [vmem:[#allocation3 + $0x10] sm:$0xff]
    %v377 = vld [vmem:[#allocation3 + $0x18] sm:$0xff]
    %v378 = vld [vmem:[#allocation3 + $0x20] sm:$0xff]
    %v379 = vld [vmem:[#allocation3 + $0x28] sm:$0xff]
    %v380 = vld [vmem:[#allocation3 + $0x30] sm:$0xff]
    %v381 = vld [vmem:[#allocation3 + $0x38] sm:$0xff]
    %v382 = vld [vmem:[#allocation3 + $0x40] sm:$0xff]
    %v383 = vld [vmem:[#allocation3 + $0x48] sm:$0xff]
    %v384 = vld [vmem:[#allocation3 + $0x50] sm:$0xff]
    %v385 = vld [vmem:[#allocation3 + $0x58] sm:$0xff]
    %v386 = vld [vmem:[#allocation3 + $0x60] sm:$0xff]
    %v387 = vld [vmem:[#allocation3 + $0x68] sm:$0xff]
    %v388 = vld [vmem:[#allocation3 + $0x70] sm:$0xff]
    %v389 = vld [vmem:[#allocation3 + $0x78] sm:$0xff]
    %v390 = vld [vmem:[#allocation3 + $0x80] sm:$0xff]
    %v391 = vld [vmem:[#allocation3 + $0x88] sm:$0xff]
    %v392 = vld [vmem:[#allocation3 + $0x90] sm:$0xff]
    %v393 = vld [vmem:[#allocation3 + $0x98] sm:$0xff]
    %v394 = vld [vmem:[#allocation3 + $0xa0] sm:$0xff]
    %v395 = vld [vmem:[#allocation3 + $0xa8] sm:$0xff]
    %v396 = vld [vmem:[#allocation3 + $0xb0] sm:$0xff]
    %v397 = vld [vmem:[#allocation3 + $0xb8] sm:$0xff]
    %v398 = vld [vmem:[#allocation3 + $0xc0] sm:$0xff]
    %v399 = vld [vmem:[#allocation3 + $0xc8] sm:$0xff]
    %v400 = vld [vmem:[#allocation3 + $0xd0] sm:$0xff]
    %v401 = vld [vmem:[#allocation3 + $0xd8] sm:$0xff]
    %v402 = vld [vmem:[#allocation3 + $0xe0] sm:$0xff]
    %v403 = vld [vmem:[#allocation3 + $0xe8] sm:$0xff]
    %v404 = vld [vmem:[#allocation3 + $0xf0] sm:$0xff]
    %v405 = vld [vmem:[#allocation3 + $0xf8] sm:$0xff]
    %v406 = vld [vmem:[#allocation3 + $0x100] sm:$0xff]
    %v407 = vld [vmem:[#allocation3 + $0x108] sm:$0xff]
    %v408 = vld [vmem:[#allocation3 + $0x110] sm:$0xff]
    %v409 = vld [vmem:[#allocation3 + $0x118] sm:$0xff]
    %v410 = vld [vmem:[#allocation3 + $0x120] sm:$0xff]
    %v411 = vld [vmem:[#allocation3 + $0x128] sm:$0xff]
    %v412 = vld [vmem:[#allocation3 + $0x130] sm:$0xff]
    %v413 = vld [vmem:[#allocation3 + $0x138] sm:$0xff]
    %v414 = vld [vmem:[#allocation3 + $0x140] sm:$0xff]
    %v415 = vld [vmem:[#allocation3 + $0x148] sm:$0xff]
    %v416 = vld [vmem:[#allocation3 + $0x150] sm:$0xff]
    %v417 = vld [vmem:[#allocation3 + $0x158] sm:$0xff]
    %v418 = vld [vmem:[#allocation3 + $0x160] sm:$0xff]
    %v419 = vld [vmem:[#allocation3 + $0x168] sm:$0xff]
    %v420 = vld [vmem:[#allocation3 + $0x170] sm:$0xff]
    %v421 = vld [vmem:[#allocation3 + $0x178] sm:$0xff]
    %v422 = vld [vmem:[#allocation3 + $0x180] sm:$0xff]
    %v423 = vld [vmem:[#allocation3 + $0x188] sm:$0xff]
    %v424 = vld [vmem:[#allocation3 + $0x190] sm:$0xff]
    %v425 = vld [vmem:[#allocation3 + $0x198] sm:$0xff]
    %v426 = vld [vmem:[#allocation3 + $0x1a0] sm:$0xff]
    %v427 = vld [vmem:[#allocation3 + $0x1a8] sm:$0xff]
    %v428 = vld [vmem:[#allocation3 + $0x1b0] sm:$0xff]
    %v429 = vld [vmem:[#allocation3 + $0x1b8] sm:$0xff]
    %v430 = vld [vmem:[#allocation3 + $0x1c0] sm:$0xff]
    %v431 = vld [vmem:[#allocation3 + $0x1c8] sm:$0xff]
    %v432 = vld [vmem:[#allocation3 + $0x1d0] sm:$0xff]
    %v433 = vld [vmem:[#allocation3 + $0x1d8] sm:$0xff]
    %v434 = vld [vmem:[#allocation3 + $0x1e0] sm:$0xff]
    %v435 = vld [vmem:[#allocation3 + $0x1e8] sm:$0xff]
    %v436 = vld [vmem:[#allocation3 + $0x1f0] sm:$0xff]
    %v437 = vld [vmem:[#allocation3 + $0x1f8] sm:$0xff]
    %v438 = vld [vmem:[#allocation3 + $0x200] sm:$0xff]
    %v439 = vld [vmem:[#allocation3 + $0x208] sm:$0xff]
    %v440 = vld [vmem:[#allocation3 + $0x210] sm:$0xff]
    %v441 = vld [vmem:[#allocation3 + $0x218] sm:$0xff]
    %v442 = vld [vmem:[#allocation3 + $0x220] sm:$0xff]
    %v443 = vld [vmem:[#allocation3 + $0x228] sm:$0xff]
    %v444 = vld [vmem:[#allocation3 + $0x230] sm:$0xff]
    %v445 = vld [vmem:[#allocation3 + $0x238] sm:$0xff]
    %v446 = vld [vmem:[#allocation3 + $0x240] sm:$0xff]
    %v447 = vld [vmem:[#allocation3 + $0x248] sm:$0xff]
    %v448 = vld [vmem:[#allocation3 + $0x250] sm:$0xff]
    %v449 = vld [vmem:[#allocation3 + $0x258] sm:$0xff]
    %v450 = vld [vmem:[#allocation3 + $0x260] sm:$0xff]
    %v451 = vld [vmem:[#allocation3 + $0x268] sm:$0xff]
    %v452 = vld [vmem:[#allocation3 + $0x270] sm:$0xff]
    %v453 = vld [vmem:[#allocation3 + $0x278] sm:$0xff]
    %v454 = vld [vmem:[#allocation3 + $0x280] sm:$0xff]
    %v455 = vld [vmem:[#allocation3 + $0x288] sm:$0xff]
    %v456 = vld [vmem:[#allocation3 + $0x290] sm:$0xff]
    %v457 = vld [vmem:[#allocation3 + $0x298] sm:$0xff]
    %v458 = vld [vmem:[#allocation3 + $0x2a0] sm:$0xff]
    %v459 = vld [vmem:[#allocation3 + $0x2a8] sm:$0xff]
    %v460 = vld [vmem:[#allocation3 + $0x2b0] sm:$0xff]
    %v461 = vld [vmem:[#allocation3 + $0x2b8] sm:$0xff]
    %v462 = vld [vmem:[#allocation3 + $0x2c0] sm:$0xff]
    %v463 = vld [vmem:[#allocation3 + $0x2c8] sm:$0xff]
    %v464 = vld [vmem:[#allocation3 + $0x2d0] sm:$0xff]
    %v465 = vld [vmem:[#allocation3 + $0x2d8] sm:$0xff]
    %v466 = vld [vmem:[#allocation3 + $0x2e0] sm:$0xff]
    %v467 = vld [vmem:[#allocation3 + $0x2e8] sm:$0xff]
    %v468 = vld [vmem:[#allocation3 + $0x2f0] sm:$0xff]
    %v469 = vld [vmem:[#allocation3 + $0x2f8] sm:$0xff]
    %v470 = vld [vmem:[#allocation3 + $0x300] sm:$0xff]
    %v471 = vld [vmem:[#allocation3 + $0x308] sm:$0xff]
    %v472 = vld [vmem:[#allocation3 + $0x310] sm:$0xff]
    %v473 = vld [vmem:[#allocation3 + $0x318] sm:$0xff]
    %v474 = vld [vmem:[#allocation3 + $0x320] sm:$0xff]
    %v475 = vld [vmem:[#allocation3 + $0x328] sm:$0xff]
    %v476 = vld [vmem:[#allocation3 + $0x330] sm:$0xff]
    %v477 = vld [vmem:[#allocation3 + $0x338] sm:$0xff]
    %v478 = vld [vmem:[#allocation3 + $0x340] sm:$0xff]
    %v479 = vld [vmem:[#allocation3 + $0x348] sm:$0xff]
    %v480 = vld [vmem:[#allocation3 + $0x350] sm:$0xff]
    %v481 = vld [vmem:[#allocation3 + $0x358] sm:$0xff]
    %v482 = vld [vmem:[#allocation3 + $0x360] sm:$0xff]
    %v483 = vld [vmem:[#allocation3 + $0x368] sm:$0xff]
    %v484 = vld [vmem:[#allocation3 + $0x370] sm:$0xff]
    %v485 = vld [vmem:[#allocation3 + $0x378] sm:$0xff]
    %v486 = vld [vmem:[#allocation3 + $0x380] sm:$0xff]
    %v487 = vld [vmem:[#allocation3 + $0x388] sm:$0xff]
    %v488 = vld [vmem:[#allocation3 + $0x390] sm:$0xff]
    %v489 = vld [vmem:[#allocation3 + $0x398] sm:$0xff]
    %v490 = vld [vmem:[#allocation3 + $0x3a0] sm:$0xff]
    %v491 = vld [vmem:[#allocation3 + $0x3a8] sm:$0xff]
    %v492 = vld [vmem:[#allocation3 + $0x3b0] sm:$0xff]
    %v493 = vld [vmem:[#allocation3 + $0x3b8] sm:$0xff]
    %v494 = vld [vmem:[#allocation3 + $0x3c0] sm:$0xff]
    %v495 = vld [vmem:[#allocation3 + $0x3c8] sm:$0xff]
    %v496 = vld [vmem:[#allocation3 + $0x3d0] sm:$0xff]
    %v497 = vld [vmem:[#allocation3 + $0x3d8] sm:$0xff]
    %v498 = vld [vmem:[#allocation3 + $0x3e0] sm:$0xff]
    %v499 = vld [vmem:[#allocation3 + $0x3e8] sm:$0xff]
    %v500 = vld [vmem:[#allocation3 + $0x3f0] sm:$0xff]
    %v501 = vld [vmem:[#allocation3 + $0x3f8] sm:$0xff]
    %v502 = vld [vmem:[#allocation3 + $0x400] sm:$0xff]
    %v503 = vld [vmem:[#allocation3 + $0x408] sm:$0xff]
    %v504 = vld [vmem:[#allocation3 + $0x410] sm:$0xff]
    %v505 = vld [vmem:[#allocation3 + $0x418] sm:$0xff]
    %v506 = vld [vmem:[#allocation3 + $0x420] sm:$0xff]
    %v507 = vld [vmem:[#allocation3 + $0x428] sm:$0xff]
    %v508 = vld [vmem:[#allocation3 + $0x430] sm:$0xff]
    %v509 = vld [vmem:[#allocation3 + $0x438] sm:$0xff]
    %v510 = vld [vmem:[#allocation3 + $0x440] sm:$0xff]
    %v511 = vld [vmem:[#allocation3 + $0x448] sm:$0xff]
    %v512 = vld [vmem:[#allocation3 + $0x450] sm:$0xff]
    %v513 = vld [vmem:[#allocation3 + $0x458] sm:$0xff]
    %v514 = vld [vmem:[#allocation3 + $0x460] sm:$0xff]
    %v515 = vld [vmem:[#allocation3 + $0x468] sm:$0xff]
    %v516 = vld [vmem:[#allocation3 + $0x470] sm:$0xff]
    %v517 = vld [vmem:[#allocation3 + $0x478] sm:$0xff]
    %v518 = vld [vmem:[#allocation3 + $0x480] sm:$0xff]
    %v519 = vld [vmem:[#allocation3 + $0x488] sm:$0xff]
    %v520 = vld [vmem:[#allocation3 + $0x490] sm:$0xff]
    %v521 = vld [vmem:[#allocation3 + $0x498] sm:$0xff]
    %v522 = vld [vmem:[#allocation3 + $0x4a0] sm:$0xff]
    %v523 = vld [vmem:[#allocation3 + $0x4a8] sm:$0xff]
    %v524 = vld [vmem:[#allocation3 + $0x4b0] sm:$0xff]
    %v525 = vld [vmem:[#allocation3 + $0x4b8] sm:$0xff]
    %v526 = vld [vmem:[#allocation3 + $0x4c0] sm:$0xff]
    %v527 = vld [vmem:[#allocation3 + $0x4c8] sm:$0xff]
    %v528 = vld [vmem:[#allocation3 + $0x4d0] sm:$0xff]
    %v529 = vld [vmem:[#allocation3 + $0x4d8] sm:$0xff]
    %v530 = vld [vmem:[#allocation3 + $0x4e0] sm:$0xff]
    %v531 = vld [vmem:[#allocation3 + $0x4e8] sm:$0xff]
    %v532 = vld [vmem:[#allocation3 + $0x4f0] sm:$0xff]
    %v533 = vld [vmem:[#allocation3 + $0x4f8] sm:$0xff]
    %v534 = vld [vmem:[#allocation3 + $0x500] sm:$0xff]
    %v535 = vld [vmem:[#allocation3 + $0x508] sm:$0xff]
    %v536 = vld [vmem:[#allocation3 + $0x510] sm:$0xff]
    %v537 = vld [vmem:[#allocation3 + $0x518] sm:$0xff]
    %v538 = vld [vmem:[#allocation3 + $0x520] sm:$0xff]
    %v539 = vld [vmem:[#allocation3 + $0x528] sm:$0xff]
    %v540 = vld [vmem:[#allocation3 + $0x530] sm:$0xff]
    %v541 = vld [vmem:[#allocation3 + $0x538] sm:$0xff]
    %v542 = vld [vmem:[#allocation3 + $0x540] sm:$0xff]
    %v543 = vld [vmem:[#allocation3 + $0x548] sm:$0xff]
    %v544 = vld [vmem:[#allocation3 + $0x550] sm:$0xff]
    %v545 = vld [vmem:[#allocation3 + $0x558] sm:$0xff]
    %v546 = vld [vmem:[#allocation3 + $0x560] sm:$0xff]
    %v547 = vld [vmem:[#allocation3 + $0x568] sm:$0xff]
    %v548 = vld [vmem:[#allocation3 + $0x570] sm:$0xff]
    %v549 = vld [vmem:[#allocation3 + $0x578] sm:$0xff]
    %v550 = vld [vmem:[#allocation3 + $0x580] sm:$0xff]
    %v551 = vld [vmem:[#allocation3 + $0x588] sm:$0xff]
    %v552 = vld [vmem:[#allocation3 + $0x590] sm:$0xff]
    %v553 = vld [vmem:[#allocation3 + $0x598] sm:$0xff]
    %v554 = vld [vmem:[#allocation3 + $0x5a0] sm:$0xff]
    %v555 = vld [vmem:[#allocation3 + $0x5a8] sm:$0xff]
    %v556 = vld [vmem:[#allocation3 + $0x5b0] sm:$0xff]
    %v557 = vld [vmem:[#allocation3 + $0x5b8] sm:$0xff]
    %v558 = vld [vmem:[#allocation3 + $0x5c0] sm:$0xff]
    %v559 = vld [vmem:[#allocation3 + $0x5c8] sm:$0xff]
    %v560 = vld [vmem:[#allocation3 + $0x5d0] sm:$0xff]
    %v561 = vld [vmem:[#allocation3 + $0x5d8] sm:$0xff]
    %v562 = vld [vmem:[#allocation3 + $0x5e0] sm:$0xff]
    %v563 = vld [vmem:[#allocation3 + $0x5e8] sm:$0xff]
    %v564 = vld [vmem:[#allocation3 + $0x5f0] sm:$0xff]
    %v565 = vld [vmem:[#allocation3 + $0x5f8] sm:$0xff]
    %v566 = vld [vmem:[#allocation3 + $0x600] sm:$0xff]
    %v567 = vld [vmem:[#allocation3 + $0x608] sm:$0xff]
    %v568 = vld [vmem:[#allocation3 + $0x610] sm:$0xff]
    %v569 = vld [vmem:[#allocation3 + $0x618] sm:$0xff]
    %v570 = vld [vmem:[#allocation3 + $0x620] sm:$0xff]
    %v571 = vld [vmem:[#allocation3 + $0x628] sm:$0xff]
    %v572 = vld [vmem:[#allocation3 + $0x630] sm:$0xff]
    %v573 = vld [vmem:[#allocation3 + $0x638] sm:$0xff]
    %v574 = vld [vmem:[#allocation5] sm:$0xff]
    %v575 = vld [vmem:[#allocation5 + $0x8] sm:$0xff]
    %v576 = vld [vmem:[#allocation5 + $0x10] sm:$0xff]
    %v577 = vld [vmem:[#allocation5 + $0x18] sm:$0xff]
    %v578 = vld [vmem:[#allocation5 + $0x20] sm:$0xff]
    %v579 = vld [vmem:[#allocation5 + $0x28] sm:$0xff]
    %v580 = vld [vmem:[#allocation5 + $0x30] sm:$0xff]
    %v581 = vld [vmem:[#allocation5 + $0x38] sm:$0xff]
    %v582 = vld [vmem:[#allocation5 + $0x40] sm:$0xff]
    %v583 = vld [vmem:[#allocation5 + $0x48] sm:$0xff]
    %v584 = vld [vmem:[#allocation5 + $0x50] sm:$0xff]
    %v585 = vld [vmem:[#allocation5 + $0x58] sm:$0xff]
    %v586 = vld [vmem:[#allocation5 + $0x60] sm:$0xff]
    %v587 = vld [vmem:[#allocation5 + $0x68] sm:$0xff]
    %v588 = vld [vmem:[#allocation5 + $0x70] sm:$0xff]
    %v589 = vld [vmem:[#allocation5 + $0x78] sm:$0xff]
    %v590 = vld [vmem:[#allocation5 + $0x80] sm:$0xff]
    %v591 = vld [vmem:[#allocation5 + $0x88] sm:$0xff]
    %v592 = vld [vmem:[#allocation5 + $0x90] sm:$0xff]
    %v593 = vld [vmem:[#allocation5 + $0x98] sm:$0xff]
    %v594 = vld [vmem:[#allocation5 + $0xa0] sm:$0xff]
    %v595 = vld [vmem:[#allocation5 + $0xa8] sm:$0xff]
    %v596 = vld [vmem:[#allocation5 + $0xb0] sm:$0xff]
    %v597 = vld [vmem:[#allocation5 + $0xb8] sm:$0xff]
    %v598 = vld [vmem:[#allocation5 + $0xc0] sm:$0xff]
    %v599 = vld [vmem:[#allocation5 + $0xc8] sm:$0xff]
    %v600 = vld [vmem:[#allocation5 + $0xd0] sm:$0xff]
    %v601 = vld [vmem:[#allocation5 + $0xd8] sm:$0xff]
    %v602 = vld [vmem:[#allocation5 + $0xe0] sm:$0xff]
    %v603 = vld [vmem:[#allocation5 + $0xe8] sm:$0xff]
    %v604 = vld [vmem:[#allocation5 + $0xf0] sm:$0xff]
    %v605 = vld [vmem:[#allocation5 + $0xf8] sm:$0xff]
    %v606 = vld [vmem:[#allocation5 + $0x100] sm:$0xff]
    %v607 = vld [vmem:[#allocation5 + $0x108] sm:$0xff]
    %v608 = vld [vmem:[#allocation5 + $0x110] sm:$0xff]
    %v609 = vld [vmem:[#allocation5 + $0x118] sm:$0xff]
    %v610 = vld [vmem:[#allocation5 + $0x120] sm:$0xff]
    %v611 = vld [vmem:[#allocation5 + $0x128] sm:$0xff]
    %v612 = vld [vmem:[#allocation5 + $0x130] sm:$0xff]
    %v613 = vld [vmem:[#allocation5 + $0x138] sm:$0xff]
    %v614 = vld [vmem:[#allocation5 + $0x140] sm:$0xff]
    %v615 = vld [vmem:[#allocation5 + $0x148] sm:$0xff]
    %v616 = vld [vmem:[#allocation5 + $0x150] sm:$0xff]
    %v617 = vld [vmem:[#allocation5 + $0x158] sm:$0xff]
    %v618 = vld [vmem:[#allocation5 + $0x160] sm:$0xff]
    %v619 = vld [vmem:[#allocation5 + $0x168] sm:$0xff]
    %v620 = vld [vmem:[#allocation5 + $0x170] sm:$0xff]
    %v621 = vld [vmem:[#allocation5 + $0x178] sm:$0xff]
    %v622 = vld [vmem:[#allocation5 + $0x180] sm:$0xff]
    %v623 = vld [vmem:[#allocation5 + $0x188] sm:$0xff]
    %v624 = vld [vmem:[#allocation5 + $0x190] sm:$0xff]
    %v625 = vld [vmem:[#allocation5 + $0x198] sm:$0xff]
    %v626 = vld [vmem:[#allocation5 + $0x1a0] sm:$0xff]
    %v627 = vld [vmem:[#allocation5 + $0x1a8] sm:$0xff]
    %v628 = vld [vmem:[#allocation5 + $0x1b0] sm:$0xff]
    %v629 = vld [vmem:[#allocation5 + $0x1b8] sm:$0xff]
    %v630 = vld [vmem:[#allocation5 + $0x1c0] sm:$0xff]
    %v631 = vld [vmem:[#allocation5 + $0x1c8] sm:$0xff]
    %v632 = vld [vmem:[#allocation5 + $0x1d0] sm:$0xff]
    %v633 = vld [vmem:[#allocation5 + $0x1d8] sm:$0xff]
    %v634 = vld [vmem:[#allocation5 + $0x1e0] sm:$0xff]
    %v635 = vld [vmem:[#allocation5 + $0x1e8] sm:$0xff]
    %v636 = vld [vmem:[#allocation5 + $0x1f0] sm:$0xff]
    %v637 = vld [vmem:[#allocation5 + $0x1f8] sm:$0xff]
    %v638 = vld [vmem:[#allocation5 + $0x200] sm:$0xff]
    %v639 = vld [vmem:[#allocation5 + $0x208] sm:$0xff]
    %v640 = vld [vmem:[#allocation5 + $0x210] sm:$0xff]
    %v641 = vld [vmem:[#allocation5 + $0x218] sm:$0xff]
    %v642 = vld [vmem:[#allocation5 + $0x220] sm:$0xff]
    %v643 = vld [vmem:[#allocation5 + $0x228] sm:$0xff]
    %v644 = vld [vmem:[#allocation5 + $0x230] sm:$0xff]
    %v645 = vld [vmem:[#allocation5 + $0x238] sm:$0xff]
    %v646 = vld [vmem:[#allocation5 + $0x240] sm:$0xff]
    %v647 = vld [vmem:[#allocation5 + $0x248] sm:$0xff]
    %v648 = vld [vmem:[#allocation5 + $0x250] sm:$0xff]
    %v649 = vld [vmem:[#allocation5 + $0x258] sm:$0xff]
    %v650 = vld [vmem:[#allocation5 + $0x260] sm:$0xff]
    %v651 = vld [vmem:[#allocation5 + $0x268] sm:$0xff]
    %v652 = vld [vmem:[#allocation5 + $0x270] sm:$0xff]
    %v653 = vld [vmem:[#allocation5 + $0x278] sm:$0xff]
    %v654 = vld [vmem:[#allocation5 + $0x280] sm:$0xff]
    %v655 = vld [vmem:[#allocation5 + $0x288] sm:$0xff]
    %v656 = vld [vmem:[#allocation5 + $0x290] sm:$0xff]
    %v657 = vld [vmem:[#allocation5 + $0x298] sm:$0xff]
    %v658 = vld [vmem:[#allocation5 + $0x2a0] sm:$0xff]
    %v659 = vld [vmem:[#allocation5 + $0x2a8] sm:$0xff]
    %v660 = vld [vmem:[#allocation5 + $0x2b0] sm:$0xff]
    %v661 = vld [vmem:[#allocation5 + $0x2b8] sm:$0xff]
    %v662 = vld [vmem:[#allocation5 + $0x2c0] sm:$0xff]
    %v663 = vld [vmem:[#allocation5 + $0x2c8] sm:$0xff]
    %v664 = vld [vmem:[#allocation5 + $0x2d0] sm:$0xff]
    %v665 = vld [vmem:[#allocation5 + $0x2d8] sm:$0xff]
    %v666 = vld [vmem:[#allocation5 + $0x2e0] sm:$0xff]
    %v667 = vld [vmem:[#allocation5 + $0x2e8] sm:$0xff]
    %v668 = vld [vmem:[#allocation5 + $0x2f0] sm:$0xff]
    %v669 = vld [vmem:[#allocation5 + $0x2f8] sm:$0xff]
    %v670 = vld [vmem:[#allocation5 + $0x300] sm:$0xff]
    %v671 = vld [vmem:[#allocation5 + $0x308] sm:$0xff]
    %v672 = vld [vmem:[#allocation5 + $0x310] sm:$0xff]
    %v673 = vld [vmem:[#allocation5 + $0x318] sm:$0xff]
    %v674 = vld [vmem:[#allocation5 + $0x320] sm:$0xff]
    %v675 = vld [vmem:[#allocation5 + $0x328] sm:$0xff]
    %v676 = vld [vmem:[#allocation5 + $0x330] sm:$0xff]
    %v677 = vld [vmem:[#allocation5 + $0x338] sm:$0xff]
    %v678 = vld [vmem:[#allocation5 + $0x340] sm:$0xff]
    %v679 = vld [vmem:[#allocation5 + $0x348] sm:$0xff]
    %v680 = vld [vmem:[#allocation5 + $0x350] sm:$0xff]
    %v681 = vld [vmem:[#allocation5 + $0x358] sm:$0xff]
    %v682 = vld [vmem:[#allocation5 + $0x360] sm:$0xff]
    %v683 = vld [vmem:[#allocation5 + $0x368] sm:$0xff]
    %v684 = vld [vmem:[#allocation5 + $0x370] sm:$0xff]
    %v685 = vld [vmem:[#allocation5 + $0x378] sm:$0xff]
    %v686 = vld [vmem:[#allocation5 + $0x380] sm:$0xff]
    %v687 = vld [vmem:[#allocation5 + $0x388] sm:$0xff]
    %v688 = vld [vmem:[#allocation5 + $0x390] sm:$0xff]
    %v689 = vld [vmem:[#allocation5 + $0x398] sm:$0xff]
    %v690 = vld [vmem:[#allocation5 + $0x3a0] sm:$0xff]
    %v691 = vld [vmem:[#allocation5 + $0x3a8] sm:$0xff]
    %v692 = vld [vmem:[#allocation5 + $0x3b0] sm:$0xff]
    %v693 = vld [vmem:[#allocation5 + $0x3b8] sm:$0xff]
    %v694 = vld [vmem:[#allocation5 + $0x3c0] sm:$0xff]
    %v695 = vld [vmem:[#allocation5 + $0x3c8] sm:$0xff]
    %v696 = vld [vmem:[#allocation5 + $0x3d0] sm:$0xff]
    %v697 = vld [vmem:[#allocation5 + $0x3d8] sm:$0xff]
    %v698 = vld [vmem:[#allocation5 + $0x3e0] sm:$0xff]
    %v699 = vld [vmem:[#allocation5 + $0x3e8] sm:$0xff]
    %v700 = vld [vmem:[#allocation5 + $0x3f0] sm:$0xff]
    %v701 = vld [vmem:[#allocation5 + $0x3f8] sm:$0xff]
    %v702 = vld [vmem:[#allocation5 + $0x400] sm:$0xff]
    %v703 = vld [vmem:[#allocation5 + $0x408] sm:$0xff]
    %v704 = vld [vmem:[#allocation5 + $0x410] sm:$0xff]
    %v705 = vld [vmem:[#allocation5 + $0x418] sm:$0xff]
    %v706 = vld [vmem:[#allocation5 + $0x420] sm:$0xff]
    %v707 = vld [vmem:[#allocation5 + $0x428] sm:$0xff]
    %v708 = vld [vmem:[#allocation5 + $0x430] sm:$0xff]
    %v709 = vld [vmem:[#allocation5 + $0x438] sm:$0xff]
    %v710 = vld [vmem:[#allocation5 + $0x440] sm:$0xff]
    %v711 = vld [vmem:[#allocation5 + $0x448] sm:$0xff]
    %v712 = vld [vmem:[#allocation5 + $0x450] sm:$0xff]
    %v713 = vld [vmem:[#allocation5 + $0x458] sm:$0xff]
    %v714 = vld [vmem:[#allocation5 + $0x460] sm:$0xff]
    %v715 = vld [vmem:[#allocation5 + $0x468] sm:$0xff]
    %v716 = vld [vmem:[#allocation5 + $0x470] sm:$0xff]
    %v717 = vld [vmem:[#allocation5 + $0x478] sm:$0xff]
    %v718 = vld [vmem:[#allocation5 + $0x480] sm:$0xff]
    %v719 = vld [vmem:[#allocation5 + $0x488] sm:$0xff]
    %v720 = vld [vmem:[#allocation5 + $0x490] sm:$0xff]
    %v721 = vld [vmem:[#allocation5 + $0x498] sm:$0xff]
    %v722 = vld [vmem:[#allocation5 + $0x4a0] sm:$0xff]
    %v723 = vld [vmem:[#allocation5 + $0x4a8] sm:$0xff]
    %v724 = vld [vmem:[#allocation5 + $0x4b0] sm:$0xff]
    %v725 = vld [vmem:[#allocation5 + $0x4b8] sm:$0xff]
    %v726 = vld [vmem:[#allocation5 + $0x4c0] sm:$0xff]
    %v727 = vld [vmem:[#allocation5 + $0x4c8] sm:$0xff]
    %v728 = vld [vmem:[#allocation5 + $0x4d0] sm:$0xff]
    %v729 = vld [vmem:[#allocation5 + $0x4d8] sm:$0xff]
    %v730 = vld [vmem:[#allocation5 + $0x4e0] sm:$0xff]
    %v731 = vld [vmem:[#allocation5 + $0x4e8] sm:$0xff]
    %v732 = vld [vmem:[#allocation5 + $0x4f0] sm:$0xff]
    %v733 = vld [vmem:[#allocation5 + $0x4f8] sm:$0xff]
    %v734 = vld [vmem:[#allocation5 + $0x500] sm:$0xff]
    %v735 = vld [vmem:[#allocation5 + $0x508] sm:$0xff]
    %v736 = vld [vmem:[#allocation5 + $0x510] sm:$0xff]
    %v737 = vld [vmem:[#allocation5 + $0x518] sm:$0xff]
    %v738 = vld [vmem:[#allocation5 + $0x520] sm:$0xff]
    %v739 = vld [vmem:[#allocation5 + $0x528] sm:$0xff]
    %v740 = vld [vmem:[#allocation5 + $0x530] sm:$0xff]
    %v741 = vld [vmem:[#allocation5 + $0x538] sm:$0xff]
    %v742 = vld [vmem:[#allocation5 + $0x540] sm:$0xff]
    %v743 = vld [vmem:[#allocation5 + $0x548] sm:$0xff]
    %v744 = vld [vmem:[#allocation5 + $0x550] sm:$0xff]
    %v745 = vld [vmem:[#allocation5 + $0x558] sm:$0xff]
    %v746 = vld [vmem:[#allocation5 + $0x560] sm:$0xff]
    %v747 = vld [vmem:[#allocation5 + $0x568] sm:$0xff]
    %v748 = vld [vmem:[#allocation5 + $0x570] sm:$0xff]
    %v749 = vld [vmem:[#allocation5 + $0x578] sm:$0xff]
    %v750 = vld [vmem:[#allocation5 + $0x580] sm:$0xff]
    %v751 = vld [vmem:[#allocation5 + $0x588] sm:$0xff]
    %v752 = vld [vmem:[#allocation5 + $0x590] sm:$0xff]
    %v753 = vld [vmem:[#allocation5 + $0x598] sm:$0xff]
    %v754 = vld [vmem:[#allocation5 + $0x5a0] sm:$0xff]
    %v755 = vld [vmem:[#allocation5 + $0x5a8] sm:$0xff]
    %v756 = vld [vmem:[#allocation5 + $0x5b0] sm:$0xff]
    %v757 = vld [vmem:[#allocation5 + $0x5b8] sm:$0xff]
    %v758 = vld [vmem:[#allocation5 + $0x5c0] sm:$0xff]
    %v759 = vld [vmem:[#allocation5 + $0x5c8] sm:$0xff]
    %v760 = vld [vmem:[#allocation5 + $0x5d0] sm:$0xff]
    %v761 = vld [vmem:[#allocation5 + $0x5d8] sm:$0xff]
    %v762 = vld [vmem:[#allocation5 + $0x5e0] sm:$0xff]
    %v763 = vld [vmem:[#allocation5 + $0x5e8] sm:$0xff]
    %v764 = vld [vmem:[#allocation5 + $0x5f0] sm:$0xff]
    %v765 = vld [vmem:[#allocation5 + $0x5f8] sm:$0xff]
    %v766 = vld [vmem:[#allocation5 + $0x600] sm:$0xff]
    %v767 = vld [vmem:[#allocation5 + $0x608] sm:$0xff]
    %v768 = vld [vmem:[#allocation5 + $0x610] sm:$0xff]
    %v769 = vld [vmem:[#allocation5 + $0x618] sm:$0xff]
    %v770 = vld [vmem:[#allocation5 + $0x620] sm:$0xff]
    %v771 = vld [vmem:[#allocation5 + $0x628] sm:$0xff]
    %v772 = vld [vmem:[#allocation5 + $0x630] sm:$0xff]
    %v773 = vld [vmem:[#allocation5 + $0x638] sm:$0xff]
    %vm774 = vcmask 523264
    %v776 = vsel %vm774, %v373, 0
    %778 = vmatpush.msra.mxu0 %v649
    %779 = vmatpush.msra.mxu0 %v644
    %780 = vmatpush.msra.mxu0 %v639
    %781 = vmatpush.msra.mxu0 %v634
    %782 = vmatpush.msra.mxu0 %v629
    %783 = vmatpush.msra.mxu0 %v624
    %784 = vmatpush.msra.mxu0 %v619
    %785 = vmatpush.msra.mxu0 %v614
    %786 = vmatpush.msra.mxu0 %v609
    %787 = vmatpush.msra.mxu0 %v604
    %788 = vmatpush.msra.mxu0 %v599
    %789 = vmatpush.msra.mxu0 %v594
    %790 = vmatpush.msra.mxu0 %v589
    %791 = vmatpush.msra.mxu0 %v584
    %792 = vmatpush.msra.mxu0 %v579
    %793 = vmatpush.msra.mxu0 %v574
    %794 = vmatmul.f32.gmra.mxu0 %v371
    %v795 = vpop.f32.mrf.mxu0
    %v796 = vadd.f32 0.0, %v795
    %797 = vdwg.mxu0
    %798 = vmatpush.msra.mxu0 %v729
    %799 = vmatpush.msra.mxu0 %v724
    %800 = vmatpush.msra.mxu0 %v719
    %801 = vmatpush.msra.mxu0 %v714
    %802 = vmatpush.msra.mxu0 %v709
    %803 = vmatpush.msra.mxu0 %v704
    %804 = vmatpush.msra.mxu0 %v699
    %805 = vmatpush.msra.mxu0 %v694
    %806 = vmatpush.msra.mxu0 %v689
    %807 = vmatpush.msra.mxu0 %v684
    %808 = vmatpush.msra.mxu0 %v679
    %809 = vmatpush.msra.mxu0 %v674
    %810 = vmatpush.msra.mxu0 %v669
    %811 = vmatpush.msra.mxu0 %v664
    %812 = vmatpush.msra.mxu0 %v659
    %813 = vmatpush.msra.mxu0 %v654
    %814 = vmatmul.f32.gmra.mxu0 %v372
    %v815 = vpop.f32.mrf.mxu0
    %v816 = vadd.f32 %v796, %v815
    %817 = vdwg.mxu0
    %818 = vmatpush.msra.mxu0 0.0
    %819 = vmatpush.msra.mxu0 0.0
    %820 = vmatpush.msra.mxu0 0.0
    %821 = vmatpush.msra.mxu0 0.0
    %822 = vmatpush.msra.mxu0 0.0
    %823 = vmatpush.msra.mxu0 0.0
    %824 = vmatpush.msra.mxu0 0.0
    %825 = vmatpush.msra.mxu0 0.0
    %826 = vmatpush.msra.mxu0 %v769
    %827 = vmatpush.msra.mxu0 %v764
    %828 = vmatpush.msra.mxu0 %v759
    %829 = vmatpush.msra.mxu0 %v754
    %830 = vmatpush.msra.mxu0 %v749
    %831 = vmatpush.msra.mxu0 %v744
    %832 = vmatpush.msra.mxu0 %v739
    %833 = vmatpush.msra.mxu0 %v734
    %834 = vmatmul.f32.gmra.mxu0 %v776
    %v835 = vpop.f32.mrf.mxu0
    %v836 = vadd.f32 %v816, %v835
    %837 = vdwg.mxu0
    %838 = vmatpush.msra.mxu0 %v650
    %839 = vmatpush.msra.mxu0 %v645
    %840 = vmatpush.msra.mxu0 %v640
    %841 = vmatpush.msra.mxu0 %v635
    %842 = vmatpush.msra.mxu0 %v630
    %843 = vmatpush.msra.mxu0 %v625
    %844 = vmatpush.msra.mxu0 %v620
    %845 = vmatpush.msra.mxu0 %v615
    %846 = vmatpush.msra.mxu0 %v610
    %847 = vmatpush.msra.mxu0 %v605
    %848 = vmatpush.msra.mxu0 %v600
    %849 = vmatpush.msra.mxu0 %v595
    %850 = vmatpush.msra.mxu0 %v590
    %851 = vmatpush.msra.mxu0 %v585
    %852 = vmatpush.msra.mxu0 %v580
    %853 = vmatpush.msra.mxu0 %v575
    %854 = vmatmul.f32.gmra.mxu0 %v371
    %v855 = vpop.f32.mrf.mxu0
    %v856 = vadd.f32 0.0, %v855
    %857 = vdwg.mxu0
    %858 = vmatpush.msra.mxu0 %v730
    %859 = vmatpush.msra.mxu0 %v725
    %860 = vmatpush.msra.mxu0 %v720
    %861 = vmatpush.msra.mxu0 %v715
    %862 = vmatpush.msra.mxu0 %v710
    %863 = vmatpush.msra.mxu0 %v705
    %864 = vmatpush.msra.mxu0 %v700
    %865 = vmatpush.msra.mxu0 %v695
    %866 = vmatpush.msra.mxu0 %v690
    %867 = vmatpush.msra.mxu0 %v685
    %868 = vmatpush.msra.mxu0 %v680
    %869 = vmatpush.msra.mxu0 %v675
    %870 = vmatpush.msra.mxu0 %v670
    %871 = vmatpush.msra.mxu0 %v665
    %872 = vmatpush.msra.mxu0 %v660
    %873 = vmatpush.msra.mxu0 %v655
    %874 = vmatmul.f32.gmra.mxu0 %v372
    %v875 = vpop.f32.mrf.mxu0
    %v876 = vadd.f32 %v856, %v875
    %877 = vdwg.mxu0
    %878 = vmatpush.msra.mxu0 0.0
    %879 = vmatpush.msra.mxu0 0.0
    %880 = vmatpush.msra.mxu0 0.0
    %881 = vmatpush.msra.mxu0 0.0
    %882 = vmatpush.msra.mxu0 0.0
    %883 = vmatpush.msra.mxu0 0.0
    %884 = vmatpush.msra.mxu0 0.0
    %885 = vmatpush.msra.mxu0 0.0
    %886 = vmatpush.msra.mxu0 %v770
    %887 = vmatpush.msra.mxu0 %v765
    %888 = vmatpush.msra.mxu0 %v760
    %889 = vmatpush.msra.mxu0 %v755
    %890 = vmatpush.msra.mxu0 %v750
    %891 = vmatpush.msra.mxu0 %v745
    %892 = vmatpush.msra.mxu0 %v740
    %893 = vmatpush.msra.mxu0 %v735
    %894 = vmatmul.f32.gmra.mxu0 %v776
    %v895 = vpop.f32.mrf.mxu0
    %v896 = vadd.f32 %v876, %v895
    %897 = vdwg.mxu0
    %898 = vmatpush.msra.mxu0 %v651
    %899 = vmatpush.msra.mxu0 %v646
    %900 = vmatpush.msra.mxu0 %v641
    %901 = vmatpush.msra.mxu0 %v636
    %902 = vmatpush.msra.mxu0 %v631
    %903 = vmatpush.msra.mxu0 %v626
    %904 = vmatpush.msra.mxu0 %v621
    %905 = vmatpush.msra.mxu0 %v616
    %906 = vmatpush.msra.mxu0 %v611
    %907 = vmatpush.msra.mxu0 %v606
    %908 = vmatpush.msra.mxu0 %v601
    %909 = vmatpush.msra.mxu0 %v596
    %910 = vmatpush.msra.mxu0 %v591
    %911 = vmatpush.msra.mxu0 %v586
    %912 = vmatpush.msra.mxu0 %v581
    %913 = vmatpush.msra.mxu0 %v576
    %914 = vmatmul.f32.gmra.mxu0 %v371
    %v915 = vpop.f32.mrf.mxu0
    %v916 = vadd.f32 0.0, %v915
    %917 = vdwg.mxu0
    %918 = vmatpush.msra.mxu0 %v731
    %919 = vmatpush.msra.mxu0 %v726
    %920 = vmatpush.msra.mxu0 %v721
    %921 = vmatpush.msra.mxu0 %v716
    %922 = vmatpush.msra.mxu0 %v711
    %923 = vmatpush.msra.mxu0 %v706
    %924 = vmatpush.msra.mxu0 %v701
    %925 = vmatpush.msra.mxu0 %v696
    %926 = vmatpush.msra.mxu0 %v691
    %927 = vmatpush.msra.mxu0 %v686
    %928 = vmatpush.msra.mxu0 %v681
    %929 = vmatpush.msra.mxu0 %v676
    %930 = vmatpush.msra.mxu0 %v671
    %931 = vmatpush.msra.mxu0 %v666
    %932 = vmatpush.msra.mxu0 %v661
    %933 = vmatpush.msra.mxu0 %v656
    %934 = vmatmul.f32.gmra.mxu0 %v372
    %v935 = vpop.f32.mrf.mxu0
    %v936 = vadd.f32 %v916, %v935
    %937 = vdwg.mxu0
    %938 = vmatpush.msra.mxu0 0.0
    %939 = vmatpush.msra.mxu0 0.0
    %940 = vmatpush.msra.mxu0 0.0
    %941 = vmatpush.msra.mxu0 0.0
    %942 = vmatpush.msra.mxu0 0.0
    %943 = vmatpush.msra.mxu0 0.0
    %944 = vmatpush.msra.mxu0 0.0
    %945 = vmatpush.msra.mxu0 0.0
    %946 = vmatpush.msra.mxu0 %v771
    %947 = vmatpush.msra.mxu0 %v766
    %948 = vmatpush.msra.mxu0 %v761
    %949 = vmatpush.msra.mxu0 %v756
    %950 = vmatpush.msra.mxu0 %v751
    %951 = vmatpush.msra.mxu0 %v746
    %952 = vmatpush.msra.mxu0 %v741
    %953 = vmatpush.msra.mxu0 %v736
    %954 = vmatmul.f32.gmra.mxu0 %v776
    %v955 = vpop.f32.mrf.mxu0
    %v956 = vadd.f32 %v936, %v955
    %957 = vdwg.mxu0
    %958 = vmatpush.msra.mxu0 %v652
    %959 = vmatpush.msra.mxu0 %v647
    %960 = vmatpush.msra.mxu0 %v642
    %961 = vmatpush.msra.mxu0 %v637
    %962 = vmatpush.msra.mxu0 %v632
    %963 = vmatpush.msra.mxu0 %v627
    %964 = vmatpush.msra.mxu0 %v622
    %965 = vmatpush.msra.mxu0 %v617
    %966 = vmatpush.msra.mxu0 %v612
    %967 = vmatpush.msra.mxu0 %v607
    %968 = vmatpush.msra.mxu0 %v602
    %969 = vmatpush.msra.mxu0 %v597
    %970 = vmatpush.msra.mxu0 %v592
    %971 = vmatpush.msra.mxu0 %v587
    %972 = vmatpush.msra.mxu0 %v582
    %973 = vmatpush.msra.mxu0 %v577
    %974 = vmatmul.f32.gmra.mxu0 %v371
    %v975 = vpop.f32.mrf.mxu0
    %v976 = vadd.f32 0.0, %v975
    %977 = vdwg.mxu0
    %978 = vmatpush.msra.mxu0 %v732
    %979 = vmatpush.msra.mxu0 %v727
    %980 = vmatpush.msra.mxu0 %v722
    %981 = vmatpush.msra.mxu0 %v717
    %982 = vmatpush.msra.mxu0 %v712
    %983 = vmatpush.msra.mxu0 %v707
    %984 = vmatpush.msra.mxu0 %v702
    %985 = vmatpush.msra.mxu0 %v697
    %986 = vmatpush.msra.mxu0 %v692
    %987 = vmatpush.msra.mxu0 %v687
    %988 = vmatpush.msra.mxu0 %v682
    %989 = vmatpush.msra.mxu0 %v677
    %990 = vmatpush.msra.mxu0 %v672
    %991 = vmatpush.msra.mxu0 %v667
    %992 = vmatpush.msra.mxu0 %v662
    %993 = vmatpush.msra.mxu0 %v657
    %994 = vmatmul.f32.gmra.mxu0 %v372
    %v995 = vpop.f32.mrf.mxu0
    %v996 = vadd.f32 %v976, %v995
    %997 = vdwg.mxu0
    %998 = vmatpush.msra.mxu0 0.0
    %999 = vmatpush.msra.mxu0 0.0
    %1000 = vmatpush.msra.mxu0 0.0
    %1001 = vmatpush.msra.mxu0 0.0
    %1002 = vmatpush.msra.mxu0 0.0
    %1003 = vmatpush.msra.mxu0 0.0
    %1004 = vmatpush.msra.mxu0 0.0
    %1005 = vmatpush.msra.mxu0 0.0
    %1006 = vmatpush.msra.mxu0 %v772
    %1007 = vmatpush.msra.mxu0 %v767
    %1008 = vmatpush.msra.mxu0 %v762
    %1009 = vmatpush.msra.mxu0 %v757
    %1010 = vmatpush.msra.mxu0 %v752
    %1011 = vmatpush.msra.mxu0 %v747
    %1012 = vmatpush.msra.mxu0 %v742
    %1013 = vmatpush.msra.mxu0 %v737
    %1014 = vmatmul.f32.gmra.mxu0 %v776
    %v1015 = vpop.f32.mrf.mxu0
    %v1016 = vadd.f32 %v996, %v1015
    %1017 = vdwg.mxu0
    %1018 = vmatpush.msra.mxu0 %v653
    %1019 = vmatpush.msra.mxu0 %v648
    %1020 = vmatpush.msra.mxu0 %v643
    %1021 = vmatpush.msra.mxu0 %v638
    %1022 = vmatpush.msra.mxu0 %v633
    %1023 = vmatpush.msra.mxu0 %v628
    %1024 = vmatpush.msra.mxu0 %v623
    %1025 = vmatpush.msra.mxu0 %v618
    %1026 = vmatpush.msra.mxu0 %v613
    %1027 = vmatpush.msra.mxu0 %v608
    %1028 = vmatpush.msra.mxu0 %v603
    %1029 = vmatpush.msra.mxu0 %v598
    %1030 = vmatpush.msra.mxu0 %v593
    %1031 = vmatpush.msra.mxu0 %v588
    %1032 = vmatpush.msra.mxu0 %v583
    %1033 = vmatpush.msra.mxu0 %v578
    %1034 = vmatmul.f32.gmra.mxu0 %v371
    %v1035 = vpop.f32.mrf.mxu0
    %v1036 = vadd.f32 0.0, %v1035
    %1037 = vdwg.mxu0
    %1038 = vmatpush.msra.mxu0 %v733
    %1039 = vmatpush.msra.mxu0 %v728
    %1040 = vmatpush.msra.mxu0 %v723
    %1041 = vmatpush.msra.mxu0 %v718
    %1042 = vmatpush.msra.mxu0 %v713
    %1043 = vmatpush.msra.mxu0 %v708
    %1044 = vmatpush.msra.mxu0 %v703
    %1045 = vmatpush.msra.mxu0 %v698
    %1046 = vmatpush.msra.mxu0 %v693
    %1047 = vmatpush.msra.mxu0 %v688
    %1048 = vmatpush.msra.mxu0 %v683
    %1049 = vmatpush.msra.mxu0 %v678
    %1050 = vmatpush.msra.mxu0 %v673
    %1051 = vmatpush.msra.mxu0 %v668
    %1052 = vmatpush.msra.mxu0 %v663
    %1053 = vmatpush.msra.mxu0 %v658
    %1054 = vmatmul.f32.gmra.mxu0 %v372
    %v1055 = vpop.f32.mrf.mxu0
    %v1056 = vadd.f32 %v1036, %v1055
    %1057 = vdwg.mxu0
    %1058 = vmatpush.msra.mxu0 0.0
    %1059 = vmatpush.msra.mxu0 0.0
    %1060 = vmatpush.msra.mxu0 0.0
    %1061 = vmatpush.msra.mxu0 0.0
    %1062 = vmatpush.msra.mxu0 0.0
    %1063 = vmatpush.msra.mxu0 0.0
    %1064 = vmatpush.msra.mxu0 0.0
    %1065 = vmatpush.msra.mxu0 0.0
    %1066 = vmatpush.msra.mxu0 %v773
    %1067 = vmatpush.msra.mxu0 %v768
    %1068 = vmatpush.msra.mxu0 %v763
    %1069 = vmatpush.msra.mxu0 %v758
    %1070 = vmatpush.msra.mxu0 %v753
    %1071 = vmatpush.msra.mxu0 %v748
    %1072 = vmatpush.msra.mxu0 %v743
    %1073 = vmatpush.msra.mxu0 %v738
    %1074 = vmatmul.f32.gmra.mxu0 %v776
    %v1075 = vpop.f32.mrf.mxu0
    %v1076 = vadd.f32 %v1056, %v1075
    %1077 = vdwg.mxu0
    %v1079 = vsel %vm774, %v240, 0
    %1081 = vmatpush.msra.mxu0 %v449
    %1082 = vmatpush.msra.mxu0 %v444
    %1083 = vmatpush.msra.mxu0 %v439
    %1084 = vmatpush.msra.mxu0 %v434
    %1085 = vmatpush.msra.mxu0 %v429
    %1086 = vmatpush.msra.mxu0 %v424
    %1087 = vmatpush.msra.mxu0 %v419
    %1088 = vmatpush.msra.mxu0 %v414
    %1089 = vmatpush.msra.mxu0 %v409
    %1090 = vmatpush.msra.mxu0 %v404
    %1091 = vmatpush.msra.mxu0 %v399
    %1092 = vmatpush.msra.mxu0 %v394
    %1093 = vmatpush.msra.mxu0 %v389
    %1094 = vmatpush.msra.mxu0 %v384
    %1095 = vmatpush.msra.mxu0 %v379
    %1096 = vmatpush.msra.mxu0 %v374
    %1097 = vmatmul.f32.gmra.mxu0 %v238
    %v1098 = vpop.f32.mrf.mxu0
    %v1099 = vadd.f32 %v836, %v1098
    %1100 = vdwg.mxu0
    %1101 = vmatpush.msra.mxu0 %v529
    %1102 = vmatpush.msra.mxu0 %v524
    %1103 = vmatpush.msra.mxu0 %v519
    %1104 = vmatpush.msra.mxu0 %v514
    %1105 = vmatpush.msra.mxu0 %v509
    %1106 = vmatpush.msra.mxu0 %v504
    %1107 = vmatpush.msra.mxu0 %v499
    %1108 = vmatpush.msra.mxu0 %v494
    %1109 = vmatpush.msra.mxu0 %v489
    %1110 = vmatpush.msra.mxu0 %v484
    %1111 = vmatpush.msra.mxu0 %v479
    %1112 = vmatpush.msra.mxu0 %v474
    %1113 = vmatpush.msra.mxu0 %v469
    %1114 = vmatpush.msra.mxu0 %v464
    %1115 = vmatpush.msra.mxu0 %v459
    %1116 = vmatpush.msra.mxu0 %v454
    %1117 = vmatmul.f32.gmra.mxu0 %v239
    %v1118 = vpop.f32.mrf.mxu0
    %v1119 = vadd.f32 %v1099, %v1118
    %1120 = vdwg.mxu0
    %1121 = vmatpush.msra.mxu0 0.0
    %1122 = vmatpush.msra.mxu0 0.0
    %1123 = vmatpush.msra.mxu0 0.0
    %1124 = vmatpush.msra.mxu0 0.0
    %1125 = vmatpush.msra.mxu0 0.0
    %1126 = vmatpush.msra.mxu0 0.0
    %1127 = vmatpush.msra.mxu0 0.0
    %1128 = vmatpush.msra.mxu0 0.0
    %1129 = vmatpush.msra.mxu0 %v569
    %1130 = vmatpush.msra.mxu0 %v564
    %1131 = vmatpush.msra.mxu0 %v559
    %1132 = vmatpush.msra.mxu0 %v554
    %1133 = vmatpush.msra.mxu0 %v549
    %1134 = vmatpush.msra.mxu0 %v544
    %1135 = vmatpush.msra.mxu0 %v539
    %1136 = vmatpush.msra.mxu0 %v534
    %1137 = vmatmul.f32.gmra.mxu0 %v1079
    %v1138 = vpop.f32.mrf.mxu0
    %v1139 = vadd.f32 %v1119, %v1138
    %1140 = vdwg.mxu0
    %1141 = vmatpush.msra.mxu0 %v450
    %1142 = vmatpush.msra.mxu0 %v445
    %1143 = vmatpush.msra.mxu0 %v440
    %1144 = vmatpush.msra.mxu0 %v435
    %1145 = vmatpush.msra.mxu0 %v430
    %1146 = vmatpush.msra.mxu0 %v425
    %1147 = vmatpush.msra.mxu0 %v420
    %1148 = vmatpush.msra.mxu0 %v415
    %1149 = vmatpush.msra.mxu0 %v410
    %1150 = vmatpush.msra.mxu0 %v405
    %1151 = vmatpush.msra.mxu0 %v400
    %1152 = vmatpush.msra.mxu0 %v395
    %1153 = vmatpush.msra.mxu0 %v390
    %1154 = vmatpush.msra.mxu0 %v385
    %1155 = vmatpush.msra.mxu0 %v380
    %1156 = vmatpush.msra.mxu0 %v375
    %1157 = vmatmul.f32.gmra.mxu0 %v238
    %v1158 = vpop.f32.mrf.mxu0
    %v1159 = vadd.f32 %v896, %v1158
    %1160 = vdwg.mxu0
    %1161 = vmatpush.msra.mxu0 %v530
    %1162 = vmatpush.msra.mxu0 %v525
    %1163 = vmatpush.msra.mxu0 %v520
    %1164 = vmatpush.msra.mxu0 %v515
    %1165 = vmatpush.msra.mxu0 %v510
    %1166 = vmatpush.msra.mxu0 %v505
    %1167 = vmatpush.msra.mxu0 %v500
    %1168 = vmatpush.msra.mxu0 %v495
    %1169 = vmatpush.msra.mxu0 %v490
    %1170 = vmatpush.msra.mxu0 %v485
    %1171 = vmatpush.msra.mxu0 %v480
    %1172 = vmatpush.msra.mxu0 %v475
    %1173 = vmatpush.msra.mxu0 %v470
    %1174 = vmatpush.msra.mxu0 %v465
    %1175 = vmatpush.msra.mxu0 %v460
    %1176 = vmatpush.msra.mxu0 %v455
    %1177 = vmatmul.f32.gmra.mxu0 %v239
    %v1178 = vpop.f32.mrf.mxu0
    %v1179 = vadd.f32 %v1159, %v1178
    %1180 = vdwg.mxu0
    %1181 = vmatpush.msra.mxu0 0.0
    %1182 = vmatpush.msra.mxu0 0.0
    %1183 = vmatpush.msra.mxu0 0.0
    %1184 = vmatpush.msra.mxu0 0.0
    %1185 = vmatpush.msra.mxu0 0.0
    %1186 = vmatpush.msra.mxu0 0.0
    %1187 = vmatpush.msra.mxu0 0.0
    %1188 = vmatpush.msra.mxu0 0.0
    %1189 = vmatpush.msra.mxu0 %v570
    %1190 = vmatpush.msra.mxu0 %v565
    %1191 = vmatpush.msra.mxu0 %v560
    %1192 = vmatpush.msra.mxu0 %v555
    %1193 = vmatpush.msra.mxu0 %v550
    %1194 = vmatpush.msra.mxu0 %v545
    %1195 = vmatpush.msra.mxu0 %v540
    %1196 = vmatpush.msra.mxu0 %v535
    %1197 = vmatmul.f32.gmra.mxu0 %v1079
    %v1198 = vpop.f32.mrf.mxu0
    %v1199 = vadd.f32 %v1179, %v1198
    %1200 = vdwg.mxu0
    %1201 = vmatpush.msra.mxu0 %v451
    %1202 = vmatpush.msra.mxu0 %v446
    %1203 = vmatpush.msra.mxu0 %v441
    %1204 = vmatpush.msra.mxu0 %v436
    %1205 = vmatpush.msra.mxu0 %v431
    %1206 = vmatpush.msra.mxu0 %v426
    %1207 = vmatpush.msra.mxu0 %v421
    %1208 = vmatpush.msra.mxu0 %v416
    %1209 = vmatpush.msra.mxu0 %v411
    %1210 = vmatpush.msra.mxu0 %v406
    %1211 = vmatpush.msra.mxu0 %v401
    %1212 = vmatpush.msra.mxu0 %v396
    %1213 = vmatpush.msra.mxu0 %v391
    %1214 = vmatpush.msra.mxu0 %v386
    %1215 = vmatpush.msra.mxu0 %v381
    %1216 = vmatpush.msra.mxu0 %v376
    %1217 = vmatmul.f32.gmra.mxu0 %v238
    %v1218 = vpop.f32.mrf.mxu0
    %v1219 = vadd.f32 %v956, %v1218
    %1220 = vdwg.mxu0
    %1221 = vmatpush.msra.mxu0 %v531
    %1222 = vmatpush.msra.mxu0 %v526
    %1223 = vmatpush.msra.mxu0 %v521
    %1224 = vmatpush.msra.mxu0 %v516
    %1225 = vmatpush.msra.mxu0 %v511
    %1226 = vmatpush.msra.mxu0 %v506
    %1227 = vmatpush.msra.mxu0 %v501
    %1228 = vmatpush.msra.mxu0 %v496
    %1229 = vmatpush.msra.mxu0 %v491
    %1230 = vmatpush.msra.mxu0 %v486
    %1231 = vmatpush.msra.mxu0 %v481
    %1232 = vmatpush.msra.mxu0 %v476
    %1233 = vmatpush.msra.mxu0 %v471
    %1234 = vmatpush.msra.mxu0 %v466
    %1235 = vmatpush.msra.mxu0 %v461
    %1236 = vmatpush.msra.mxu0 %v456
    %1237 = vmatmul.f32.gmra.mxu0 %v239
    %v1238 = vpop.f32.mrf.mxu0
    %v1239 = vadd.f32 %v1219, %v1238
    %1240 = vdwg.mxu0
    %1241 = vmatpush.msra.mxu0 0.0
    %1242 = vmatpush.msra.mxu0 0.0
    %1243 = vmatpush.msra.mxu0 0.0
    %1244 = vmatpush.msra.mxu0 0.0
    %1245 = vmatpush.msra.mxu0 0.0
    %1246 = vmatpush.msra.mxu0 0.0
    %1247 = vmatpush.msra.mxu0 0.0
    %1248 = vmatpush.msra.mxu0 0.0
    %1249 = vmatpush.msra.mxu0 %v571
    %1250 = vmatpush.msra.mxu0 %v566
    %1251 = vmatpush.msra.mxu0 %v561
    %1252 = vmatpush.msra.mxu0 %v556
    %1253 = vmatpush.msra.mxu0 %v551
    %1254 = vmatpush.msra.mxu0 %v546
    %1255 = vmatpush.msra.mxu0 %v541
    %1256 = vmatpush.msra.mxu0 %v536
    %1257 = vmatmul.f32.gmra.mxu0 %v1079
    %v1258 = vpop.f32.mrf.mxu0
    %v1259 = vadd.f32 %v1239, %v1258
    %1260 = vdwg.mxu0
    %1261 = vmatpush.msra.mxu0 %v452
    %1262 = vmatpush.msra.mxu0 %v447
    %1263 = vmatpush.msra.mxu0 %v442
    %1264 = vmatpush.msra.mxu0 %v437
    %1265 = vmatpush.msra.mxu0 %v432
    %1266 = vmatpush.msra.mxu0 %v427
    %1267 = vmatpush.msra.mxu0 %v422
    %1268 = vmatpush.msra.mxu0 %v417
    %1269 = vmatpush.msra.mxu0 %v412
    %1270 = vmatpush.msra.mxu0 %v407
    %1271 = vmatpush.msra.mxu0 %v402
    %1272 = vmatpush.msra.mxu0 %v397
    %1273 = vmatpush.msra.mxu0 %v392
    %1274 = vmatpush.msra.mxu0 %v387
    %1275 = vmatpush.msra.mxu0 %v382
    %1276 = vmatpush.msra.mxu0 %v377
    %1277 = vmatmul.f32.gmra.mxu0 %v238
    %v1278 = vpop.f32.mrf.mxu0
    %v1279 = vadd.f32 %v1016, %v1278
    %1280 = vdwg.mxu0
    %1281 = vmatpush.msra.mxu0 %v532
    %1282 = vmatpush.msra.mxu0 %v527
    %1283 = vmatpush.msra.mxu0 %v522
    %1284 = vmatpush.msra.mxu0 %v517
    %1285 = vmatpush.msra.mxu0 %v512
    %1286 = vmatpush.msra.mxu0 %v507
    %1287 = vmatpush.msra.mxu0 %v502
    %1288 = vmatpush.msra.mxu0 %v497
    %1289 = vmatpush.msra.mxu0 %v492
    %1290 = vmatpush.msra.mxu0 %v487
    %1291 = vmatpush.msra.mxu0 %v482
    %1292 = vmatpush.msra.mxu0 %v477
    %1293 = vmatpush.msra.mxu0 %v472
    %1294 = vmatpush.msra.mxu0 %v467
    %1295 = vmatpush.msra.mxu0 %v462
    %1296 = vmatpush.msra.mxu0 %v457
    %1297 = vmatmul.f32.gmra.mxu0 %v239
    %v1298 = vpop.f32.mrf.mxu0
    %v1299 = vadd.f32 %v1279, %v1298
    %1300 = vdwg.mxu0
    %1301 = vmatpush.msra.mxu0 0.0
    %1302 = vmatpush.msra.mxu0 0.0
    %1303 = vmatpush.msra.mxu0 0.0
    %1304 = vmatpush.msra.mxu0 0.0
    %1305 = vmatpush.msra.mxu0 0.0
    %1306 = vmatpush.msra.mxu0 0.0
    %1307 = vmatpush.msra.mxu0 0.0
    %1308 = vmatpush.msra.mxu0 0.0
    %1309 = vmatpush.msra.mxu0 %v572
    %1310 = vmatpush.msra.mxu0 %v567
    %1311 = vmatpush.msra.mxu0 %v562
    %1312 = vmatpush.msra.mxu0 %v557
    %1313 = vmatpush.msra.mxu0 %v552
    %1314 = vmatpush.msra.mxu0 %v547
    %1315 = vmatpush.msra.mxu0 %v542
    %1316 = vmatpush.msra.mxu0 %v537
    %1317 = vmatmul.f32.gmra.mxu0 %v1079
    %v1318 = vpop.f32.mrf.mxu0
    %v1319 = vadd.f32 %v1299, %v1318
    %1320 = vdwg.mxu0
    %1321 = vmatpush.msra.mxu0 %v453
    %1322 = vmatpush.msra.mxu0 %v448
    %1323 = vmatpush.msra.mxu0 %v443
    %1324 = vmatpush.msra.mxu0 %v438
    %1325 = vmatpush.msra.mxu0 %v433
    %1326 = vmatpush.msra.mxu0 %v428
    %1327 = vmatpush.msra.mxu0 %v423
    %1328 = vmatpush.msra.mxu0 %v418
    %1329 = vmatpush.msra.mxu0 %v413
    %1330 = vmatpush.msra.mxu0 %v408
    %1331 = vmatpush.msra.mxu0 %v403
    %1332 = vmatpush.msra.mxu0 %v398
    %1333 = vmatpush.msra.mxu0 %v393
    %1334 = vmatpush.msra.mxu0 %v388
    %1335 = vmatpush.msra.mxu0 %v383
    %1336 = vmatpush.msra.mxu0 %v378
    %1337 = vmatmul.f32.gmra.mxu0 %v238
    %v1338 = vpop.f32.mrf.mxu0
    %v1339 = vadd.f32 %v1076, %v1338
    %1340 = vdwg.mxu0
    %1341 = vmatpush.msra.mxu0 %v533
    %1342 = vmatpush.msra.mxu0 %v528
    %1343 = vmatpush.msra.mxu0 %v523
    %1344 = vmatpush.msra.mxu0 %v518
    %1345 = vmatpush.msra.mxu0 %v513
    %1346 = vmatpush.msra.mxu0 %v508
    %1347 = vmatpush.msra.mxu0 %v503
    %1348 = vmatpush.msra.mxu0 %v498
    %1349 = vmatpush.msra.mxu0 %v493
    %1350 = vmatpush.msra.mxu0 %v488
    %1351 = vmatpush.msra.mxu0 %v483
    %1352 = vmatpush.msra.mxu0 %v478
    %1353 = vmatpush.msra.mxu0 %v473
    %1354 = vmatpush.msra.mxu0 %v468
    %1355 = vmatpush.msra.mxu0 %v463
    %1356 = vmatpush.msra.mxu0 %v458
    %1357 = vmatmul.f32.gmra.mxu0 %v239
    %v1358 = vpop.f32.mrf.mxu0
    %v1359 = vadd.f32 %v1339, %v1358
    %1360 = vdwg.mxu0
    %1361 = vmatpush.msra.mxu0 0.0
    %1362 = vmatpush.msra.mxu0 0.0
    %1363 = vmatpush.msra.mxu0 0.0
    %1364 = vmatpush.msra.mxu0 0.0
    %1365 = vmatpush.msra.mxu0 0.0
    %1366 = vmatpush.msra.mxu0 0.0
    %1367 = vmatpush.msra.mxu0 0.0
    %1368 = vmatpush.msra.mxu0 0.0
    %1369 = vmatpush.msra.mxu0 %v573
    %1370 = vmatpush.msra.mxu0 %v568
    %1371 = vmatpush.msra.mxu0 %v563
    %1372 = vmatpush.msra.mxu0 %v558
    %1373 = vmatpush.msra.mxu0 %v553
    %1374 = vmatpush.msra.mxu0 %v548
    %1375 = vmatpush.msra.mxu0 %v543
    %1376 = vmatpush.msra.mxu0 %v538
    %1377 = vmatmul.f32.gmra.mxu0 %v1079
    %v1378 = vpop.f32.mrf.mxu0
    %v1379 = vadd.f32 %v1359, %v1378
    %1380 = vdwg.mxu0
    %vm1381 = vcmp.gt.f32.partialorder %v1139, 0.0
    %vm1382 = vcmp.gt.f32.partialorder %v1199, 0.0
    %vm1383 = vcmp.gt.f32.partialorder %v1259, 0.0
    %vm1384 = vcmp.gt.f32.partialorder %v1319, 0.0
    %vm1385 = vcmp.gt.f32.partialorder %v1379, 0.0
    %v1386 = vmul.f32 %v1139, 0.1
    %v1387 = vmul.f32 %v1199, 0.1
    %v1388 = vmul.f32 %v1259, 0.1
    %v1389 = vmul.f32 %v1319, 0.1
    %v1390 = vmul.f32 %v1379, 0.1
    %v1391 = vsel %vm1381, %v1139, %v1386
    %v1392 = vsel %vm1382, %v1199, %v1387
    %v1393 = vsel %vm1383, %v1259, %v1388
    %v1394 = vsel %vm1384, %v1319, %v1389
    %v1395 = vsel %vm1385, %v1379, %v1390
    %v1396 = vld [vmem:[%s5] sm:$0xff]
    %v1397 = vld [vmem:[%s5 + $0x8] sm:$0xff]
    %v1398 = vld [vmem:[%s5 + $0x10] sm:$0xff]
    %v1399 = vld [vmem:[%s5 + $0x18] sm:$0xff]
    %v1400 = vld [vmem:[%s5 + $0x20] sm:$0xff]
    %v1401 = vld [vmem:[%s5 + $0x28] sm:$0xff]
    %v1402 = vld [vmem:[%s5 + $0x30] sm:$0xff]
    %v1403 = vld [vmem:[%s5 + $0x38] sm:$0xff]
    %v1404 = vld [vmem:[%s5 + $0x40] sm:$0xff]
    %v1405 = vld [vmem:[%s5 + $0x48] sm:$0xff]
    %v1406 = vld [vmem:[%s5 + $0x50] sm:$0xff]
    %v1407 = vld [vmem:[%s5 + $0x58] sm:$0xff]
    %v1408 = vld [vmem:[%s5 + $0x60] sm:$0xff]
    %v1409 = vld [vmem:[%s5 + $0x68] sm:$0xff]
    %v1410 = vld [vmem:[%s5 + $0x70] sm:$0xff]
    %v1411 = vld [vmem:[%s5 + $0x78] sm:$0xff]
    %v1412 = vld [vmem:[%s5 + $0x80] sm:$0xff]
    %v1413 = vld [vmem:[%s5 + $0x88] sm:$0xff]
    %v1414 = vld [vmem:[%s5 + $0x90] sm:$0xff]
    %v1415 = vld [vmem:[%s5 + $0x98] sm:$0xff]
    %v1416 = vld [vmem:[%s5 + $0xa0] sm:$0xff]
    %v1417 = vld [vmem:[%s5 + $0xa8] sm:$0xff]
    %v1418 = vld [vmem:[%s5 + $0xb0] sm:$0xff]
    %v1419 = vld [vmem:[%s5 + $0xb8] sm:$0xff]
    %v1420 = vld [vmem:[%s5 + $0xc0] sm:$0xff]
    %v1421 = vld [vmem:[%s5 + $0xc8] sm:$0xff]
    %v1422 = vld [vmem:[%s5 + $0xd0] sm:$0xff]
    %v1423 = vld [vmem:[%s5 + $0xd8] sm:$0xff]
    %v1424 = vld [vmem:[%s5 + $0xe0] sm:$0xff]
    %v1425 = vld [vmem:[%s5 + $0xe8] sm:$0xff]
    %v1426 = vld [vmem:[%s5 + $0xf0] sm:$0xff]
    %v1427 = vld [vmem:[%s5 + $0xf8] sm:$0xff]
    %v1428 = vld [vmem:[%s5 + $0x100] sm:$0xff]
    %v1429 = vld [vmem:[%s5 + $0x108] sm:$0xff]
    %v1430 = vld [vmem:[%s5 + $0x110] sm:$0xff]
    %v1431 = vld [vmem:[%s5 + $0x118] sm:$0xff]
    %v1432 = vld [vmem:[%s5 + $0x120] sm:$0xff]
    %v1433 = vld [vmem:[%s5 + $0x128] sm:$0xff]
    %v1434 = vld [vmem:[%s5 + $0x130] sm:$0xff]
    %v1435 = vld [vmem:[%s5 + $0x138] sm:$0xff]
    %v1436 = vld [vmem:[%s5 + $0x140] sm:$0xff]
    %v1437 = vld [vmem:[%s5 + $0x148] sm:$0xff]
    %v1438 = vld [vmem:[%s5 + $0x150] sm:$0xff]
    %v1439 = vld [vmem:[%s5 + $0x158] sm:$0xff]
    %v1440 = vld [vmem:[%s5 + $0x160] sm:$0xff]
    %v1441 = vld [vmem:[%s5 + $0x168] sm:$0xff]
    %v1442 = vld [vmem:[%s5 + $0x170] sm:$0xff]
    %v1443 = vld [vmem:[%s5 + $0x178] sm:$0xff]
    %v1444 = vld [vmem:[%s5 + $0x180] sm:$0xff]
    %v1445 = vld [vmem:[%s5 + $0x188] sm:$0xff]
    %v1446 = vld [vmem:[%s5 + $0x190] sm:$0xff]
    %v1447 = vld [vmem:[%s5 + $0x198] sm:$0xff]
    %v1448 = vld [vmem:[%s5 + $0x1a0] sm:$0xff]
    %v1449 = vld [vmem:[%s5 + $0x1a8] sm:$0xff]
    %v1450 = vld [vmem:[%s5 + $0x1b0] sm:$0xff]
    %v1451 = vld [vmem:[%s5 + $0x1b8] sm:$0xff]
    %v1452 = vld [vmem:[%s5 + $0x1c0] sm:$0xff]
    %v1453 = vld [vmem:[%s5 + $0x1c8] sm:$0xff]
    %v1454 = vld [vmem:[%s5 + $0x1d0] sm:$0xff]
    %v1455 = vld [vmem:[%s5 + $0x1d8] sm:$0xff]
    %v1456 = vld [vmem:[%s5 + $0x1e0] sm:$0xff]
    %v1457 = vld [vmem:[%s5 + $0x1e8] sm:$0xff]
    %v1458 = vld [vmem:[%s5 + $0x1f0] sm:$0xff]
    %v1459 = vld [vmem:[%s5 + $0x1f8] sm:$0xff]
    %v1460 = vld [vmem:[%s5 + $0x200] sm:$0xff]
    %v1461 = vld [vmem:[%s5 + $0x208] sm:$0xff]
    %v1462 = vld [vmem:[%s5 + $0x210] sm:$0xff]
    %v1463 = vld [vmem:[%s5 + $0x218] sm:$0xff]
    %v1464 = vld [vmem:[%s5 + $0x220] sm:$0xff]
    %v1465 = vld [vmem:[%s5 + $0x228] sm:$0xff]
    %v1466 = vld [vmem:[%s5 + $0x230] sm:$0xff]
    %v1467 = vld [vmem:[%s5 + $0x238] sm:$0xff]
    %v1468 = vld [vmem:[%s5 + $0x240] sm:$0xff]
    %v1469 = vld [vmem:[%s5 + $0x248] sm:$0xff]
    %v1470 = vld [vmem:[%s5 + $0x250] sm:$0xff]
    %v1471 = vld [vmem:[%s5 + $0x258] sm:$0xff]
    %v1472 = vld [vmem:[%s5 + $0x260] sm:$0xff]
    %v1473 = vld [vmem:[%s5 + $0x268] sm:$0xff]
    %v1474 = vld [vmem:[%s5 + $0x270] sm:$0xff]
    %v1475 = vld [vmem:[%s5 + $0x278] sm:$0xff]
    %v1476 = vld [vmem:[%s6] sm:$0x1]
    %v1478 = vperm.slane %v1476, 0
    %1480 = vmatpush.msra.mxu0 %v1411
    %1481 = vmatpush.msra.mxu0 %v1410
    %1482 = vmatpush.msra.mxu0 %v1409
    %1483 = vmatpush.msra.mxu0 %v1408
    %1484 = vmatpush.msra.mxu0 %v1407
    %1485 = vmatpush.msra.mxu0 %v1406
    %1486 = vmatpush.msra.mxu0 %v1405
    %1487 = vmatpush.msra.mxu0 %v1404
    %1488 = vmatpush.msra.mxu0 %v1403
    %1489 = vmatpush.msra.mxu0 %v1402
    %1490 = vmatpush.msra.mxu0 %v1401
    %1491 = vmatpush.msra.mxu0 %v1400
    %1492 = vmatpush.msra.mxu0 %v1399
    %1493 = vmatpush.msra.mxu0 %v1398
    %1494 = vmatpush.msra.mxu0 %v1397
    %1495 = vmatpush.msra.mxu0 %v1396
    %1496 = vmatmul.f32.gmra.mxu0 %v1391
    %v1497 = vpop.f32.mrf.mxu0
    %v1498 = vadd.f32 %v1478, %v1497
    %1499 = vdwg.mxu0
    %1500 = vmatpush.msra.mxu0 %v1427
    %1501 = vmatpush.msra.mxu0 %v1426
    %1502 = vmatpush.msra.mxu0 %v1425
    %1503 = vmatpush.msra.mxu0 %v1424
    %1504 = vmatpush.msra.mxu0 %v1423
    %1505 = vmatpush.msra.mxu0 %v1422
    %1506 = vmatpush.msra.mxu0 %v1421
    %1507 = vmatpush.msra.mxu0 %v1420
    %1508 = vmatpush.msra.mxu0 %v1419
    %1509 = vmatpush.msra.mxu0 %v1418
    %1510 = vmatpush.msra.mxu0 %v1417
    %1511 = vmatpush.msra.mxu0 %v1416
    %1512 = vmatpush.msra.mxu0 %v1415
    %1513 = vmatpush.msra.mxu0 %v1414
    %1514 = vmatpush.msra.mxu0 %v1413
    %1515 = vmatpush.msra.mxu0 %v1412
    %1516 = vmatmul.f32.gmra.mxu0 %v1392
    %v1517 = vpop.f32.mrf.mxu0
    %v1518 = vadd.f32 %v1498, %v1517
    %1519 = vdwg.mxu0
    %1520 = vmatpush.msra.mxu0 %v1443
    %1521 = vmatpush.msra.mxu0 %v1442
    %1522 = vmatpush.msra.mxu0 %v1441
    %1523 = vmatpush.msra.mxu0 %v1440
    %1524 = vmatpush.msra.mxu0 %v1439
    %1525 = vmatpush.msra.mxu0 %v1438
    %1526 = vmatpush.msra.mxu0 %v1437
    %1527 = vmatpush.msra.mxu0 %v1436
    %1528 = vmatpush.msra.mxu0 %v1435
    %1529 = vmatpush.msra.mxu0 %v1434
    %1530 = vmatpush.msra.mxu0 %v1433
    %1531 = vmatpush.msra.mxu0 %v1432
    %1532 = vmatpush.msra.mxu0 %v1431
    %1533 = vmatpush.msra.mxu0 %v1430
    %1534 = vmatpush.msra.mxu0 %v1429
    %1535 = vmatpush.msra.mxu0 %v1428
    %1536 = vmatmul.f32.gmra.mxu0 %v1393
    %v1537 = vpop.f32.mrf.mxu0
    %v1538 = vadd.f32 %v1518, %v1537
    %1539 = vdwg.mxu0
    %1540 = vmatpush.msra.mxu0 %v1459
    %1541 = vmatpush.msra.mxu0 %v1458
    %1542 = vmatpush.msra.mxu0 %v1457
    %1543 = vmatpush.msra.mxu0 %v1456
    %1544 = vmatpush.msra.mxu0 %v1455
    %1545 = vmatpush.msra.mxu0 %v1454
    %1546 = vmatpush.msra.mxu0 %v1453
    %1547 = vmatpush.msra.mxu0 %v1452
    %1548 = vmatpush.msra.mxu0 %v1451
    %1549 = vmatpush.msra.mxu0 %v1450
    %1550 = vmatpush.msra.mxu0 %v1449
    %1551 = vmatpush.msra.mxu0 %v1448
    %1552 = vmatpush.msra.mxu0 %v1447
    %1553 = vmatpush.msra.mxu0 %v1446
    %1554 = vmatpush.msra.mxu0 %v1445
    %1555 = vmatpush.msra.mxu0 %v1444
    %1556 = vmatmul.f32.gmra.mxu0 %v1394
    %v1557 = vpop.f32.mrf.mxu0
    %v1558 = vadd.f32 %v1538, %v1557
    %1559 = vdwg.mxu0
    %1560 = vmatpush.msra.mxu0 %v1475
    %1561 = vmatpush.msra.mxu0 %v1474
    %1562 = vmatpush.msra.mxu0 %v1473
    %1563 = vmatpush.msra.mxu0 %v1472
    %1564 = vmatpush.msra.mxu0 %v1471
    %1565 = vmatpush.msra.mxu0 %v1470
    %1566 = vmatpush.msra.mxu0 %v1469
    %1567 = vmatpush.msra.mxu0 %v1468
    %1568 = vmatpush.msra.mxu0 %v1467
    %1569 = vmatpush.msra.mxu0 %v1466
    %1570 = vmatpush.msra.mxu0 %v1465
    %1571 = vmatpush.msra.mxu0 %v1464
    %1572 = vmatpush.msra.mxu0 %v1463
    %1573 = vmatpush.msra.mxu0 %v1462
    %1574 = vmatpush.msra.mxu0 %v1461
    %1575 = vmatpush.msra.mxu0 %v1460
    %1576 = vmatmul.f32.gmra.mxu0 %v1395
    %v1577 = vpop.f32.mrf.mxu0
    %v1578 = vadd.f32 %v1558, %v1577
    %1579 = vdwg.mxu0
    %vm1580 = vcmp.gt.f32.partialorder %v1578, 0.0
    %v1581 = vmul.f32 %v1578, 0.1
    %v1582 = vsel %vm1580, %v1578, %v1581
    %v1583 = vld [vmem:[%s7] sm:$0xff]
    %v1584 = vld [vmem:[%s7 + $0x8] sm:$0xff]
    %v1585 = vld [vmem:[%s7 + $0x10] sm:$0xff]
    %v1586 = vld [vmem:[%s7 + $0x18] sm:$0xff]
    %v1587 = vld [vmem:[%s7 + $0x20] sm:$0xff]
    %v1588 = vld [vmem:[%s7 + $0x28] sm:$0xff]
    %v1589 = vld [vmem:[%s7 + $0x30] sm:$0xff]
    %v1590 = vld [vmem:[%s7 + $0x38] sm:$0xff]
    %v1591 = vld [vmem:[%s8] sm:$0x1]
    %v1593 = vperm.slane %v1591, 0
    %v1596 = vsel %vm774, %v1582, 0
    %1598 = vmatpush.msra.mxu0 0.0
    %1599 = vmatpush.msra.mxu0 0.0
    %1600 = vmatpush.msra.mxu0 0.0
    %1601 = vmatpush.msra.mxu0 0.0
    %1602 = vmatpush.msra.mxu0 0.0
    %1603 = vmatpush.msra.mxu0 0.0
    %1604 = vmatpush.msra.mxu0 0.0
    %1605 = vmatpush.msra.mxu0 0.0
    %1606 = vmatpush.msra.mxu0 %v1590
    %1607 = vmatpush.msra.mxu0 %v1589
    %1608 = vmatpush.msra.mxu0 %v1588
    %1609 = vmatpush.msra.mxu0 %v1587
    %1610 = vmatpush.msra.mxu0 %v1586
    %1611 = vmatpush.msra.mxu0 %v1585
    %1612 = vmatpush.msra.mxu0 %v1584
    %1613 = vmatpush.msra.mxu0 %v1583
    %1614 = vmatmul.f32.gmra.mxu0 %v1596
    %v1615 = vpop.f32.mrf.mxu0
    %v1616 = vadd.f32 %v1593, %v1615
    %1617 = vdwg.mxu0
    %vm1618 = vcmp.gt.f32.partialorder %v1616, 0.0
    %v1619 = vmul.f32 %v1616, 0.1
    %v1620 = vsel %vm1618, %v1616, %v1619
    %v1621 = vld [vmem:[%s9] sm:$0x1]
    %v1623 = vperm.slane %v1621, 0
    %v1625 = vmul.f32 %v1620, %v1623
    %vm1626 = vcmask 261120
    %v1627 = vsel %vm1626, %v1625, 0.0
    %1628 = vadd.xlane.f32.xlu0 %v1627
    %v1629 = vpop.xlane.xlu0 %1628
    %v1630 = vld [vmem:[#allocation2] sm:$0x1]
    %v1632 = vperm.slane %v1630, 0
    %v1634 = vadd.f32 %v1629, %v1632
    %1636 = vset.pattern.permute.xlu0 0
    %1637 = vperm.xlu0 %1636, %v1634
    %v1638 = vpop.permute.xlu0 %1637
    %1640 = vst [vmem:[%s11] sm:$0xff] %v1638
    // Predicated region
    $region54: #{discriminator_forward.1} parent=1 // pred_check
      _
    $region55: #{discriminator_forward.1} parent=1 // pred_check_branch
      %1642 = sbr.rel (0) target = $region57
    $region56: #{discriminator_forward.1} parent=1 // pred_region
      _
    $region57: #{discriminator_forward.1} parent=1 // pred_fallthru
      _
    // Predicated region
    $region58: #{discriminator_forward.1} parent=1 // pred_check
      _
    $region59: #{discriminator_forward.1} parent=1 // pred_check_branch
      %1644 = sbr.rel (0) target = $region61
    $region60: #{discriminator_forward.1} parent=1 // pred_region
      _
    $region61: #{discriminator_forward.1} parent=1 // pred_fallthru
      _
    %1645 = vsyncpa [#allocation4], 1
    %1646 = vsyncpa [#allocation6], 1

</llo_original>
